<compile_context>
chip_gen: v5e
topology: v5e:2x2
jax: 0.10.0
libtpu: 0.0.40
codegen_flags: <defaults>
</compile_context>

<pallas_src>
import functools

import jax
import jax.numpy as jnp
from jax.experimental import pallas as pl
from jax.experimental.pallas import tpu as pltpu

EPS = 0.8  # nn.BatchNorm2d(in_features, 0.8): second positional arg is eps


def resblock_kernel(x_ref, w1_ref, b1_ref, g1_ref, be1_ref, alpha_ref,
                    w2_ref, b2_ref, g2_ref, be2_ref,
                    out_ref, xpad_ref, patch_ref, *, width, pad):
    """Fused Conv-BN-PReLU-Conv-BN-residual block.

    x_ref:       (B, C, H*W)        f32  input (NCHW, H,W flattened; lane-dense)
    w*_ref:      (C, 9*C)           f32  conv weights, K ordered (tap, ci)
    b*/g*/be*:   (C, 1)             f32  conv bias / BN gamma / BN beta
    alpha_ref:   (1,)               f32  PReLU parameter (SMEM)
    out_ref:     (B, C, H*W)        f32
    xpad_ref:    (B*C, H*W + 2*pad) f32  scratch: batched zero-padded halo rows
    patch_ref:   (9*C, B*H*W)       f32  scratch: batched im2col patch matrix
    """
    B, C, HW = x_ref.shape
    W = width

    # One-time setup: zero the halo pad columns (the interior is rewritten per
    # conv, the pads never are) and build the two W-edge validity masks.
    xpad_ref[...] = jnp.zeros_like(xpad_ref)
    wcol = jax.lax.broadcasted_iota(jnp.int32, (1, HW), 1) % W
    valid_wm1 = wcol >= 1          # left neighbour (dx-1 == -1) exists
    valid_wp1 = wcol <= W - 2      # right neighbour (dx-1 == +1) exists

    def conv3x3(load_image, wm_ref, bias_ref):
        # im2col against the batched zero-padded flat row buffer, then ONE
        # (C, 9C) x (9C, B*HW) MXU matmul for the whole batch.
        for b in range(B):
            xpad_ref[b * C:(b + 1) * C, pad:pad + HW] = load_image(b)
        for dy in range(3):
            for dx in range(3):
                s = (dy - 1) * W + (dx - 1)                # flat tap offset
                tap = xpad_ref[:, pad + s:pad + s + HW]    # (B*C, HW), one read
                if dx == 0:
                    tap = jnp.where(valid_wm1, tap, 0.0)
                elif dx == 2:
                    tap = jnp.where(valid_wp1, tap, 0.0)
                # dy out-of-image reads land in the zero pad columns: no mask.
                t = dy * 3 + dx
                for b in range(B):                         # lane-aligned cols
                    patch_ref[t * C:(t + 1) * C, b * HW:(b + 1) * HW] = (
                        tap[b * C:(b + 1) * C, :])
        return (jnp.dot(wm_ref[...], patch_ref[...],
                        preferred_element_type=jnp.float32) + bias_ref[...])

    inv_n = 1.0 / float(B * HW)

    def bn_scale_shift(z, g_ref, be_ref):
        # Single-pass biased batch stats folded into per-channel scale/shift.
        mu = jnp.sum(z, axis=1, keepdims=True) * inv_n
        var = jnp.sum(z * z, axis=1, keepdims=True) * inv_n - mu * mu
        scale = g_ref[...] * jax.lax.rsqrt(var + EPS)
        shift = be_ref[...] - mu * scale
        return scale, shift

    # ---- conv1 (+bias), fused BN1 batch stats ------------------------------
    z1 = conv3x3(lambda b: x_ref[b], w1_ref, b1_ref)          # (C, B*HW)
    scale1, shift1 = bn_scale_shift(z1, g1_ref, be1_ref)

    # ---- BN1 affine + PReLU (single alpha), whole batch at once ------------
    alpha = alpha_ref[0]
    h = z1 * scale1 + shift1
    h = jnp.where(h > 0, h, alpha * h)

    # ---- conv2 (+bias), fused BN2 batch stats ------------------------------
    z2 = conv3x3(lambda b: h[:, b * HW:(b + 1) * HW], w2_ref, b2_ref)
    scale2, shift2 = bn_scale_shift(z2, g2_ref, be2_ref)

    # ---- BN2 affine + residual add (block input re-sliced per image) -------
    for b in range(B):
        out_ref[b] = x_ref[b] + z2[:, b * HW:(b + 1) * HW] * scale2 + shift2


def residual_block(x_nchw, params):
    """x_nchw: (B, C, H, W) float32.  Returns (B, C, H, W) float32."""
    w1, b1, g1, be1, alpha, w2, b2, g2, be2 = params
    B, C, H, W = x_nchw.shape
    HW = H * W
    PAD = ((W + 1 + 127) // 128) * 128   # halo pad, keeps interior store aligned

    # Boundary glue is free: NCHW is row-major, so (B,C,H,W)->(B,C,H*W) and
    # back are metadata-only reshapes (no pad, no transpose, no HBM traffic).
    x_flat = x_nchw.reshape(B, C, HW).astype(jnp.float32)
    # HWIO (3,3,Ci,Co) -> (Co, 9*Ci), K ordered (tap, ci) to match the kernel.
    w1m = jnp.transpose(w1.reshape(9 * C, C))
    w2m = jnp.transpose(w2.reshape(9 * C, C))

    vmem = pl.BlockSpec(memory_space=pltpu.MemorySpace.VMEM)
    smem = pl.BlockSpec(memory_space=pltpu.MemorySpace.SMEM)

    kernel = functools.partial(resblock_kernel, width=W, pad=PAD)
    out_flat = pl.pallas_call(
        kernel,
        out_shape=jax.ShapeDtypeStruct((B, C, HW), jnp.float32),
        in_specs=[vmem,                      # x
                  vmem, vmem, vmem, vmem,    # w1m, b1, g1, be1
                  smem,                      # alpha (scalar)
                  vmem, vmem, vmem, vmem],   # w2m, b2, g2, be2
        out_specs=vmem,
        scratch_shapes=[
            pltpu.VMEM((B * C, HW + 2 * PAD), jnp.float32),  # batched halo rows
            pltpu.VMEM((9 * C, B * HW), jnp.float32),        # batched im2col
        ],
        compiler_params=pltpu.CompilerParams(
            vmem_limit_bytes=32 * 1024 * 1024),
        cost_estimate=pl.CostEstimate(
            flops=2 * 2 * 9 * C * C * B * HW,
            transcendentals=2 * C,
            bytes_accessed=2 * B * C * HW * 4),
    )(x_flat,
      w1m, b1.reshape(C, 1), g1.reshape(C, 1), be1.reshape(C, 1),
      alpha.reshape(1),
      w2m, b2.reshape(C, 1), g2.reshape(C, 1), be2.reshape(C, 1))

    return out_flat.reshape(B, C, H, W)


# ------------------------- pure-JAX reference ------------------------------
def ref_residual_block(x_nchw, params):
    w1, b1, g1, be1, alpha, w2, b2, g2, be2 = params

    def conv(x, w_hwio, b):
        y = jax.lax.conv_general_dilated(
            x, w_hwio, window_strides=(1, 1), padding="SAME",
            dimension_numbers=("NCHW", "HWIO", "NCHW"))
        return y + b[None, :, None, None]

    def bn(x, g, be):
        mu = jnp.mean(x, axis=(0, 2, 3), keepdims=True)
        var = jnp.mean((x - mu) ** 2, axis=(0, 2, 3), keepdims=True)
        return ((x - mu) / jnp.sqrt(var + EPS) * g[None, :, None, None]
                + be[None, :, None, None])

    h = bn(conv(x_nchw, w1, b1), g1, be1)
    h = jnp.where(h > 0, h, alpha * h)
    h = bn(conv(h, w2, b2), g2, be2)
    return x_nchw + h


# ------------------------------ main ----------------------------------------
if __name__ == "__main__":
    B, C, H, W = 2, 4, 16, 16
    key = jax.random.PRNGKey(0)
    keys = jax.random.split(key, 8)

    x = jax.random.normal(keys[0], (B, C, H, W), jnp.float32)

    # Conv weights stored HWIO: (3, 3, Cin, Cout).
    w1 = jax.random.normal(keys[1], (3, 3, C, C), jnp.float32) * 0.2
    b1 = jax.random.normal(keys[2], (C,), jnp.float32) * 0.1
    w2 = jax.random.normal(keys[3], (3, 3, C, C), jnp.float32) * 0.2
    b2 = jax.random.normal(keys[4], (C,), jnp.float32) * 0.1
    # BatchNorm affine params (gamma ~1, beta random for coverage).
    g1 = 1.0 + 0.1 * jax.random.normal(keys[5], (C,), jnp.float32)
    be1 = 0.1 * jax.random.normal(keys[6], (C,), jnp.float32)
    g2 = jnp.ones((C,), jnp.float32)
    be2 = jnp.zeros((C,), jnp.float32)
    # PReLU single parameter, PyTorch default init 0.25.
    alpha = jnp.array(0.25, jnp.float32)

    params = (w1, b1, g1, be1, alpha, w2, b2, g2, be2)

    out = jax.block_until_ready(residual_block(x, params))
    ref = jax.block_until_ready(ref_residual_block(x, params))

    assert out.shape == (B, C, H, W)
    err = float(jnp.max(jnp.abs(out - ref)))
    assert err < 1e-4, err
    print("KERNEL_OK")
</pallas_src>

<mosaic_0001>
module attributes {stable_mosaic.version = 11 : i64} {
  func.func @resblock_kernel(%arg0: memref<2x4x256xf32, #tpu.memory_space<vmem>>, %arg1: memref<4x36xf32, #tpu.memory_space<vmem>>, %arg2: memref<4x1xf32, #tpu.memory_space<vmem>>, %arg3: memref<4x1xf32, #tpu.memory_space<vmem>>, %arg4: memref<4x1xf32, #tpu.memory_space<vmem>>, %arg5: memref<1xf32, #tpu.memory_space<smem>>, %arg6: memref<4x36xf32, #tpu.memory_space<vmem>>, %arg7: memref<4x1xf32, #tpu.memory_space<vmem>>, %arg8: memref<4x1xf32, #tpu.memory_space<vmem>>, %arg9: memref<4x1xf32, #tpu.memory_space<vmem>>, %arg10: memref<2x4x256xf32, #tpu.memory_space<vmem>>, %arg11: memref<8x512xf32, #tpu.memory_space<vmem>>, %arg12: memref<36x512xf32, #tpu.memory_space<vmem>>) attributes {dimension_semantics = [], scalar_prefetch = 0 : i64, scratch_operands = 2 : i64, tpu.core_type = #tpu.core_type<tc>} {
    %cst = arith.constant 0.000000e+00 : f32
    %0 = vector.broadcast %cst : f32 to vector<8x512xf32>
    %c0 = arith.constant 0 : index
    %c0_0 = arith.constant 0 : index
    %1 = vector.load %arg11[%c0, %c0_0] : memref<8x512xf32, #tpu.memory_space<vmem>>, vector<8x512xf32>
    tpu.vector_store %arg11[%c0, %c0_0], %0 {strides = array<i32>} : memref<8x512xf32, #tpu.memory_space<vmem>>, vector<8x512xf32>,
    %2 = tpu.iota {dimensions = array<i32: 1>} : vector<1x256xi32>
    %c16_i32 = arith.constant 16 : i32
    %c0_i32 = arith.constant 0 : i32
    %3 = arith.cmpi eq, %c16_i32, %c0_i32 : i32
    %c1_i32 = arith.constant 1 : i32
    %4 = arith.select %3, %c1_i32, %c16_i32 : i32
    %5 = vector.broadcast %4 : i32 to vector<1x256xi32>
    %6 = arith.remsi %2, %5 : vector<1x256xi32>
    %c0_i32_1 = arith.constant 0 : i32
    %7 = vector.broadcast %c0_i32_1 : i32 to vector<1x256xi32>
    %8 = arith.cmpi ne, %6, %7 : vector<1x256xi32>
    %c0_i32_2 = arith.constant 0 : i32
    %9 = vector.broadcast %c0_i32_2 : i32 to vector<1x256xi32>
    %10 = arith.cmpi slt, %6, %9 : vector<1x256xi32>
    %c0_i32_3 = arith.constant 0 : i32
    %11 = arith.cmpi slt, %4, %c0_i32_3 : i32
    %12 = vector.broadcast %11 : i1 to vector<1x256xi1>
    %13 = vector.broadcast %12 : vector<1x256xi1> to vector<1x256xi1>
    %14 = arith.xori %10, %13 : vector<1x256xi1>
    %15 = arith.andi %14, %8 : vector<1x256xi1>
    %16 = vector.broadcast %4 : i32 to vector<1x256xi32>
    %17 = arith.addi %6, %16 : vector<1x256xi32>
    %18 = arith.select %15, %17, %6 : vector<1x256xi1>, vector<1x256xi32>
    %c1_i32_4 = arith.constant 1 : i32
    %19 = vector.broadcast %c1_i32_4 : i32 to vector<1x256xi32>
    %20 = arith.cmpi sge, %18, %19 : vector<1x256xi32>
    %c14_i32 = arith.constant 14 : i32
    %21 = vector.broadcast %c14_i32 : i32 to vector<1x256xi32>
    %22 = arith.cmpi sle, %18, %21 : vector<1x256xi32>
    %c0_5 = arith.constant 0 : index
    %c0_6 = arith.constant 0 : index
    %c0_7 = arith.constant 0 : index
    %23 = vector.load %arg0[%c0_5, %c0_6, %c0_7] : memref<2x4x256xf32, #tpu.memory_space<vmem>>, vector<1x4x256xf32>
    %24 = vector.shape_cast %23 : vector<1x4x256xf32> to vector<4x256xf32>
    %c0_8 = arith.constant 0 : index
    %c128 = arith.constant 128 : index
    %25 = vector.load %arg11[%c0_8, %c128] : memref<8x512xf32, #tpu.memory_space<vmem>>, vector<4x256xf32>
    tpu.vector_store %arg11[%c0_8, %c128], %24 {strides = array<i32>} : memref<8x512xf32, #tpu.memory_space<vmem>>, vector<4x256xf32>,
    %c1 = arith.constant 1 : index
    %c0_9 = arith.constant 0 : index
    %c0_10 = arith.constant 0 : index
    %26 = vector.load %arg0[%c1, %c0_9, %c0_10] : memref<2x4x256xf32, #tpu.memory_space<vmem>>, vector<1x4x256xf32>
    %27 = vector.shape_cast %26 : vector<1x4x256xf32> to vector<4x256xf32>
    %c4 = arith.constant 4 : index
    %c128_11 = arith.constant 128 : index
    %28 = vector.load %arg11[%c4, %c128_11] : memref<8x512xf32, #tpu.memory_space<vmem>>, vector<4x256xf32>
    tpu.vector_store %arg11[%c4, %c128_11], %27 {strides = array<i32>} : memref<8x512xf32, #tpu.memory_space<vmem>>, vector<4x256xf32>,
    %c0_12 = arith.constant 0 : index
    %c111 = arith.constant 111 : index
    %29 = vector.load %arg11[%c0_12, %c111] : memref<8x512xf32, #tpu.memory_space<vmem>>, vector<8x256xf32>
    %cst_13 = arith.constant 0.000000e+00 : f32
    %30 = vector.shape_cast %20 : vector<1x256xi1> to vector<1x256xi1>
    %31 = vector.broadcast %30 : vector<1x256xi1> to vector<8x256xi1>
    %32 = vector.broadcast %cst_13 : f32 to vector<8x256xf32>
    %33 = arith.select %31, %29, %32 : vector<8x256xi1>, vector<8x256xf32>
    %34 = vector.extract_strided_slice %33 {offsets = [0, 0], sizes = [4, 256], strides = [1, 1]} : vector<8x256xf32> to vector<4x256xf32>
    %c0_14 = arith.constant 0 : index
    %c0_15 = arith.constant 0 : index
    %35 = vector.load %arg12[%c0_14, %c0_15] : memref<36x512xf32, #tpu.memory_space<vmem>>, vector<4x256xf32>
    tpu.vector_store %arg12[%c0_14, %c0_15], %34 {strides = array<i32>} : memref<36x512xf32, #tpu.memory_space<vmem>>, vector<4x256xf32>,
    %36 = vector.extract_strided_slice %33 {offsets = [4, 0], sizes = [4, 256], strides = [1, 1]} : vector<8x256xf32> to vector<4x256xf32>
    %c0_16 = arith.constant 0 : index
    %c256 = arith.constant 256 : index
    %37 = vector.load %arg12[%c0_16, %c256] : memref<36x512xf32, #tpu.memory_space<vmem>>, vector<4x256xf32>
    tpu.vector_store %arg12[%c0_16, %c256], %36 {strides = array<i32>} : memref<36x512xf32, #tpu.memory_space<vmem>>, vector<4x256xf32>,
    %c0_17 = arith.constant 0 : index
    %c112 = arith.constant 112 : index
    %38 = vector.load %arg11[%c0_17, %c112] : memref<8x512xf32, #tpu.memory_space<vmem>>, vector<8x256xf32>
    %39 = vector.extract_strided_slice %38 {offsets = [0, 0], sizes = [4, 256], strides = [1, 1]} : vector<8x256xf32> to vector<4x256xf32>
    %c4_18 = arith.constant 4 : index
    %c0_19 = arith.constant 0 : index
    %40 = vector.load %arg12[%c4_18, %c0_19] : memref<36x512xf32, #tpu.memory_space<vmem>>, vector<4x256xf32>
    tpu.vector_store %arg12[%c4_18, %c0_19], %39 {strides = array<i32>} : memref<36x512xf32, #tpu.memory_space<vmem>>, vector<4x256xf32>,
    %41 = vector.extract_strided_slice %38 {offsets = [4, 0], sizes = [4, 256], strides = [1, 1]} : vector<8x256xf32> to vector<4x256xf32>
    %c4_20 = arith.constant 4 : index
    %c256_21 = arith.constant 256 : index
    %42 = vector.load %arg12[%c4_20, %c256_21] : memref<36x512xf32, #tpu.memory_space<vmem>>, vector<4x256xf32>
    tpu.vector_store %arg12[%c4_20, %c256_21], %41 {strides = array<i32>} : memref<36x512xf32, #tpu.memory_space<vmem>>, vector<4x256xf32>,
    %c0_22 = arith.constant 0 : index
    %c113 = arith.constant 113 : index
    %43 = vector.load %arg11[%c0_22, %c113] : memref<8x512xf32, #tpu.memory_space<vmem>>, vector<8x256xf32>
    %cst_23 = arith.constant 0.000000e+00 : f32
    %44 = vector.shape_cast %22 : vector<1x256xi1> to vector<1x256xi1>
    %45 = vector.broadcast %44 : vector<1x256xi1> to vector<8x256xi1>
    %46 = vector.broadcast %cst_23 : f32 to vector<8x256xf32>
    %47 = arith.select %45, %43, %46 : vector<8x256xi1>, vector<8x256xf32>
    %48 = vector.extract_strided_slice %47 {offsets = [0, 0], sizes = [4, 256], strides = [1, 1]} : vector<8x256xf32> to vector<4x256xf32>
    %c8 = arith.constant 8 : index
    %c0_24 = arith.constant 0 : index
    %49 = vector.load %arg12[%c8, %c0_24] : memref<36x512xf32, #tpu.memory_space<vmem>>, vector<4x256xf32>
    tpu.vector_store %arg12[%c8, %c0_24], %48 {strides = array<i32>} : memref<36x512xf32, #tpu.memory_space<vmem>>, vector<4x256xf32>,
    %50 = vector.extract_strided_slice %47 {offsets = [4, 0], sizes = [4, 256], strides = [1, 1]} : vector<8x256xf32> to vector<4x256xf32>
    %c8_25 = arith.constant 8 : index
    %c256_26 = arith.constant 256 : index
    %51 = vector.load %arg12[%c8_25, %c256_26] : memref<36x512xf32, #tpu.memory_space<vmem>>, vector<4x256xf32>
    tpu.vector_store %arg12[%c8_25, %c256_26], %50 {strides = array<i32>} : memref<36x512xf32, #tpu.memory_space<vmem>>, vector<4x256xf32>,
    %c0_27 = arith.constant 0 : index
    %c127 = arith.constant 127 : index
    %52 = vector.load %arg11[%c0_27, %c127] : memref<8x512xf32, #tpu.memory_space<vmem>>, vector<8x256xf32>
    %cst_28 = arith.constant 0.000000e+00 : f32
    %53 = vector.shape_cast %20 : vector<1x256xi1> to vector<1x256xi1>
    %54 = vector.broadcast %53 : vector<1x256xi1> to vector<8x256xi1>
    %55 = vector.broadcast %cst_28 : f32 to vector<8x256xf32>
    %56 = arith.select %54, %52, %55 : vector<8x256xi1>, vector<8x256xf32>
    %57 = vector.extract_strided_slice %56 {offsets = [0, 0], sizes = [4, 256], strides = [1, 1]} : vector<8x256xf32> to vector<4x256xf32>
    %c12 = arith.constant 12 : index
    %c0_29 = arith.constant 0 : index
    %58 = vector.load %arg12[%c12, %c0_29] : memref<36x512xf32, #tpu.memory_space<vmem>>, vector<4x256xf32>
    tpu.vector_store %arg12[%c12, %c0_29], %57 {strides = array<i32>} : memref<36x512xf32, #tpu.memory_space<vmem>>, vector<4x256xf32>,
    %59 = vector.extract_strided_slice %56 {offsets = [4, 0], sizes = [4, 256], strides = [1, 1]} : vector<8x256xf32> to vector<4x256xf32>
    %c12_30 = arith.constant 12 : index
    %c256_31 = arith.constant 256 : index
    %60 = vector.load %arg12[%c12_30, %c256_31] : memref<36x512xf32, #tpu.memory_space<vmem>>, vector<4x256xf32>
    tpu.vector_store %arg12[%c12_30, %c256_31], %59 {strides = array<i32>} : memref<36x512xf32, #tpu.memory_space<vmem>>, vector<4x256xf32>,
    %c0_32 = arith.constant 0 : index
    %c128_33 = arith.constant 128 : index
    %61 = vector.load %arg11[%c0_32, %c128_33] : memref<8x512xf32, #tpu.memory_space<vmem>>, vector<8x256xf32>
    %62 = vector.extract_strided_slice %61 {offsets = [0, 0], sizes = [4, 256], strides = [1, 1]} : vector<8x256xf32> to vector<4x256xf32>
    %c16 = arith.constant 16 : index
    %c0_34 = arith.constant 0 : index
    %63 = vector.load %arg12[%c16, %c0_34] : memref<36x512xf32, #tpu.memory_space<vmem>>, vector<4x256xf32>
    tpu.vector_store %arg12[%c16, %c0_34], %62 {strides = array<i32>} : memref<36x512xf32, #tpu.memory_space<vmem>>, vector<4x256xf32>,
    %64 = vector.extract_strided_slice %61 {offsets = [4, 0], sizes = [4, 256], strides = [1, 1]} : vector<8x256xf32> to vector<4x256xf32>
    %c16_35 = arith.constant 16 : index
    %c256_36 = arith.constant 256 : index
    %65 = vector.load %arg12[%c16_35, %c256_36] : memref<36x512xf32, #tpu.memory_space<vmem>>, vector<4x256xf32>
    tpu.vector_store %arg12[%c16_35, %c256_36], %64 {strides = array<i32>} : memref<36x512xf32, #tpu.memory_space<vmem>>, vector<4x256xf32>,
    %c0_37 = arith.constant 0 : index
    %c129 = arith.constant 129 : index
    %66 = vector.load %arg11[%c0_37, %c129] : memref<8x512xf32, #tpu.memory_space<vmem>>, vector<8x256xf32>
    %cst_38 = arith.constant 0.000000e+00 : f32
    %67 = vector.shape_cast %22 : vector<1x256xi1> to vector<1x256xi1>
    %68 = vector.broadcast %67 : vector<1x256xi1> to vector<8x256xi1>
    %69 = vector.broadcast %cst_38 : f32 to vector<8x256xf32>
    %70 = arith.select %68, %66, %69 : vector<8x256xi1>, vector<8x256xf32>
    %71 = vector.extract_strided_slice %70 {offsets = [0, 0], sizes = [4, 256], strides = [1, 1]} : vector<8x256xf32> to vector<4x256xf32>
    %c20 = arith.constant 20 : index
    %c0_39 = arith.constant 0 : index
    %72 = vector.load %arg12[%c20, %c0_39] : memref<36x512xf32, #tpu.memory_space<vmem>>, vector<4x256xf32>
    tpu.vector_store %arg12[%c20, %c0_39], %71 {strides = array<i32>} : memref<36x512xf32, #tpu.memory_space<vmem>>, vector<4x256xf32>,
    %73 = vector.extract_strided_slice %70 {offsets = [4, 0], sizes = [4, 256], strides = [1, 1]} : vector<8x256xf32> to vector<4x256xf32>
    %c20_40 = arith.constant 20 : index
    %c256_41 = arith.constant 256 : index
    %74 = vector.load %arg12[%c20_40, %c256_41] : memref<36x512xf32, #tpu.memory_space<vmem>>, vector<4x256xf32>
    tpu.vector_store %arg12[%c20_40, %c256_41], %73 {strides = array<i32>} : memref<36x512xf32, #tpu.memory_space<vmem>>, vector<4x256xf32>,
    %c0_42 = arith.constant 0 : index
    %c143 = arith.constant 143 : index
    %75 = vector.load %arg11[%c0_42, %c143] : memref<8x512xf32, #tpu.memory_space<vmem>>, vector<8x256xf32>
    %cst_43 = arith.constant 0.000000e+00 : f32
    %76 = vector.shape_cast %20 : vector<1x256xi1> to vector<1x256xi1>
    %77 = vector.broadcast %76 : vector<1x256xi1> to vector<8x256xi1>
    %78 = vector.broadcast %cst_43 : f32 to vector<8x256xf32>
    %79 = arith.select %77, %75, %78 : vector<8x256xi1>, vector<8x256xf32>
    %80 = vector.extract_strided_slice %79 {offsets = [0, 0], sizes = [4, 256], strides = [1, 1]} : vector<8x256xf32> to vector<4x256xf32>
    %c24 = arith.constant 24 : index
    %c0_44 = arith.constant 0 : index
    %81 = vector.load %arg12[%c24, %c0_44] : memref<36x512xf32, #tpu.memory_space<vmem>>, vector<4x256xf32>
    tpu.vector_store %arg12[%c24, %c0_44], %80 {strides = array<i32>} : memref<36x512xf32, #tpu.memory_space<vmem>>, vector<4x256xf32>,
    %82 = vector.extract_strided_slice %79 {offsets = [4, 0], sizes = [4, 256], strides = [1, 1]} : vector<8x256xf32> to vector<4x256xf32>
    %c24_45 = arith.constant 24 : index
    %c256_46 = arith.constant 256 : index
    %83 = vector.load %arg12[%c24_45, %c256_46] : memref<36x512xf32, #tpu.memory_space<vmem>>, vector<4x256xf32>
    tpu.vector_store %arg12[%c24_45, %c256_46], %82 {strides = array<i32>} : memref<36x512xf32, #tpu.memory_space<vmem>>, vector<4x256xf32>,
    %c0_47 = arith.constant 0 : index
    %c144 = arith.constant 144 : index
    %84 = vector.load %arg11[%c0_47, %c144] : memref<8x512xf32, #tpu.memory_space<vmem>>, vector<8x256xf32>
    %85 = vector.extract_strided_slice %84 {offsets = [0, 0], sizes = [4, 256], strides = [1, 1]} : vector<8x256xf32> to vector<4x256xf32>
    %c28 = arith.constant 28 : index
    %c0_48 = arith.constant 0 : index
    %86 = vector.load %arg12[%c28, %c0_48] : memref<36x512xf32, #tpu.memory_space<vmem>>, vector<4x256xf32>
    tpu.vector_store %arg12[%c28, %c0_48], %85 {strides = array<i32>} : memref<36x512xf32, #tpu.memory_space<vmem>>, vector<4x256xf32>,
    %87 = vector.extract_strided_slice %84 {offsets = [4, 0], sizes = [4, 256], strides = [1, 1]} : vector<8x256xf32> to vector<4x256xf32>
    %c28_49 = arith.constant 28 : index
    %c256_50 = arith.constant 256 : index
    %88 = vector.load %arg12[%c28_49, %c256_50] : memref<36x512xf32, #tpu.memory_space<vmem>>, vector<4x256xf32>
    tpu.vector_store %arg12[%c28_49, %c256_50], %87 {strides = array<i32>} : memref<36x512xf32, #tpu.memory_space<vmem>>, vector<4x256xf32>,
    %c0_51 = arith.constant 0 : index
    %c145 = arith.constant 145 : index
    %89 = vector.load %arg11[%c0_51, %c145] : memref<8x512xf32, #tpu.memory_space<vmem>>, vector<8x256xf32>
    %cst_52 = arith.constant 0.000000e+00 : f32
    %90 = vector.shape_cast %22 : vector<1x256xi1> to vector<1x256xi1>
    %91 = vector.broadcast %90 : vector<1x256xi1> to vector<8x256xi1>
    %92 = vector.broadcast %cst_52 : f32 to vector<8x256xf32>
    %93 = arith.select %91, %89, %92 : vector<8x256xi1>, vector<8x256xf32>
    %94 = vector.extract_strided_slice %93 {offsets = [0, 0], sizes = [4, 256], strides = [1, 1]} : vector<8x256xf32> to vector<4x256xf32>
    %c32 = arith.constant 32 : index
    %c0_53 = arith.constant 0 : index
    %95 = vector.load %arg12[%c32, %c0_53] : memref<36x512xf32, #tpu.memory_space<vmem>>, vector<4x256xf32>
    tpu.vector_store %arg12[%c32, %c0_53], %94 {strides = array<i32>} : memref<36x512xf32, #tpu.memory_space<vmem>>, vector<4x256xf32>,
    %96 = vector.extract_strided_slice %93 {offsets = [4, 0], sizes = [4, 256], strides = [1, 1]} : vector<8x256xf32> to vector<4x256xf32>
    %c32_54 = arith.constant 32 : index
    %c256_55 = arith.constant 256 : index
    %97 = vector.load %arg12[%c32_54, %c256_55] : memref<36x512xf32, #tpu.memory_space<vmem>>, vector<4x256xf32>
    tpu.vector_store %arg12[%c32_54, %c256_55], %96 {strides = array<i32>} : memref<36x512xf32, #tpu.memory_space<vmem>>, vector<4x256xf32>,
    %c0_56 = arith.constant 0 : index
    %c0_57 = arith.constant 0 : index
    %98 = vector.load %arg1[%c0_56, %c0_57] : memref<4x36xf32, #tpu.memory_space<vmem>>, vector<4x36xf32>
    %c0_58 = arith.constant 0 : index
    %c0_59 = arith.constant 0 : index
    %99 = vector.load %arg12[%c0_58, %c0_59] : memref<36x512xf32, #tpu.memory_space<vmem>>, vector<36x512xf32>
    %cst_60 = arith.constant dense<0.000000e+00> : vector<4x512xf32>
    %100 = tpu.matmul %98, %99, %cst_60 {dimension_numbers = #tpu.dot_dimension_numbers<[1], [0], [0], [1], [0, 0, 1, 1], [], []>} : vector<4x36xf32>, vector<36x512xf32>, vector<4x512xf32> -> vector<4x512xf32>
    %c0_61 = arith.constant 0 : index
    %c0_62 = arith.constant 0 : index
    %101 = vector.load %arg2[%c0_61, %c0_62] : memref<4x1xf32, #tpu.memory_space<vmem>>, vector<4x1xf32>
    %102 = vector.broadcast %101 : vector<4x1xf32> to vector<4x512xf32>
    %103 = arith.addf %100, %102 : vector<4x512xf32>
    %cst_63 = arith.constant dense<0.000000e+00> : vector<4xf32>
    %104 = vector.multi_reduction <add>, %103, %cst_63 [1] : vector<4x512xf32> to vector<4xf32>
    %105 = vector.shape_cast %104 : vector<4xf32> to vector<4x1xf32>
    %cst_64 = arith.constant 0.001953125 : f32
    %106 = vector.broadcast %cst_64 : f32 to vector<4x1xf32>
    %107 = arith.mulf %105, %106 : vector<4x1xf32>
    %108 = arith.mulf %103, %103 : vector<4x512xf32>
    %cst_65 = arith.constant dense<0.000000e+00> : vector<4xf32>
    %109 = vector.multi_reduction <add>, %108, %cst_65 [1] : vector<4x512xf32> to vector<4xf32>
    %110 = vector.shape_cast %109 : vector<4xf32> to vector<4x1xf32>
    %cst_66 = arith.constant 0.001953125 : f32
    %111 = vector.broadcast %cst_66 : f32 to vector<4x1xf32>
    %112 = arith.mulf %110, %111 : vector<4x1xf32>
    %113 = arith.mulf %107, %107 : vector<4x1xf32>
    %114 = arith.subf %112, %113 : vector<4x1xf32>
    %c0_67 = arith.constant 0 : index
    %c0_68 = arith.constant 0 : index
    %115 = vector.load %arg3[%c0_67, %c0_68] : memref<4x1xf32, #tpu.memory_space<vmem>>, vector<4x1xf32>
    %cst_69 = arith.constant 8.000000e-01 : f32
    %116 = vector.broadcast %cst_69 : f32 to vector<4x1xf32>
    %117 = arith.addf %114, %116 : vector<4x1xf32>
    %118 = math.rsqrt %117 : vector<4x1xf32>
    %119 = arith.mulf %115, %118 : vector<4x1xf32>
    %c0_70 = arith.constant 0 : index
    %c0_71 = arith.constant 0 : index
    %120 = vector.load %arg4[%c0_70, %c0_71] : memref<4x1xf32, #tpu.memory_space<vmem>>, vector<4x1xf32>
    %121 = arith.mulf %107, %119 : vector<4x1xf32>
    %122 = arith.subf %120, %121 : vector<4x1xf32>
    %c0_72 = arith.constant 0 : index
    %123 = memref.load %arg5[%c0_72] : memref<1xf32, #tpu.memory_space<smem>>
    %124 = vector.broadcast %119 : vector<4x1xf32> to vector<4x512xf32>
    %125 = arith.mulf %103, %124 : vector<4x512xf32>
    %126 = vector.broadcast %122 : vector<4x1xf32> to vector<4x512xf32>
    %127 = arith.addf %125, %126 : vector<4x512xf32>
    %cst_73 = arith.constant 0.000000e+00 : f32
    %128 = vector.broadcast %cst_73 : f32 to vector<4x512xf32>
    %129 = arith.cmpf ogt, %127, %128 : vector<4x512xf32>
    %130 = vector.broadcast %123 : f32 to vector<4x512xf32>
    %131 = arith.mulf %130, %127 : vector<4x512xf32>
    %132 = arith.select %129, %127, %131 : vector<4x512xi1>, vector<4x512xf32>
    %133 = vector.extract_strided_slice %132 {offsets = [0, 0], sizes = [4, 256], strides = [1, 1]} : vector<4x512xf32> to vector<4x256xf32>
    %c0_74 = arith.constant 0 : index
    %c128_75 = arith.constant 128 : index
    %134 = vector.load %arg11[%c0_74, %c128_75] : memref<8x512xf32, #tpu.memory_space<vmem>>, vector<4x256xf32>
    tpu.vector_store %arg11[%c0_74, %c128_75], %133 {strides = array<i32>} : memref<8x512xf32, #tpu.memory_space<vmem>>, vector<4x256xf32>,
    %135 = vector.extract_strided_slice %132 {offsets = [0, 256], sizes = [4, 256], strides = [1, 1]} : vector<4x512xf32> to vector<4x256xf32>
    %c4_76 = arith.constant 4 : index
    %c128_77 = arith.constant 128 : index
    %136 = vector.load %arg11[%c4_76, %c128_77] : memref<8x512xf32, #tpu.memory_space<vmem>>, vector<4x256xf32>
    tpu.vector_store %arg11[%c4_76, %c128_77], %135 {strides = array<i32>} : memref<8x512xf32, #tpu.memory_space<vmem>>, vector<4x256xf32>,
    %c0_78 = arith.constant 0 : index
    %c111_79 = arith.constant 111 : index
    %137 = vector.load %arg11[%c0_78, %c111_79] : memref<8x512xf32, #tpu.memory_space<vmem>>, vector<8x256xf32>
    %cst_80 = arith.constant 0.000000e+00 : f32
    %138 = vector.shape_cast %20 : vector<1x256xi1> to vector<1x256xi1>
    %139 = vector.broadcast %138 : vector<1x256xi1> to vector<8x256xi1>
    %140 = vector.broadcast %cst_80 : f32 to vector<8x256xf32>
    %141 = arith.select %139, %137, %140 : vector<8x256xi1>, vector<8x256xf32>
    %142 = vector.extract_strided_slice %141 {offsets = [0, 0], sizes = [4, 256], strides = [1, 1]} : vector<8x256xf32> to vector<4x256xf32>
    %c0_81 = arith.constant 0 : index
    %c0_82 = arith.constant 0 : index
    %143 = vector.load %arg12[%c0_81, %c0_82] : memref<36x512xf32, #tpu.memory_space<vmem>>, vector<4x256xf32>
    tpu.vector_store %arg12[%c0_81, %c0_82], %142 {strides = array<i32>} : memref<36x512xf32, #tpu.memory_space<vmem>>, vector<4x256xf32>,
    %144 = vector.extract_strided_slice %141 {offsets = [4, 0], sizes = [4, 256], strides = [1, 1]} : vector<8x256xf32> to vector<4x256xf32>
    %c0_83 = arith.constant 0 : index
    %c256_84 = arith.constant 256 : index
    %145 = vector.load %arg12[%c0_83, %c256_84] : memref<36x512xf32, #tpu.memory_space<vmem>>, vector<4x256xf32>
    tpu.vector_store %arg12[%c0_83, %c256_84], %144 {strides = array<i32>} : memref<36x512xf32, #tpu.memory_space<vmem>>, vector<4x256xf32>,
    %c0_85 = arith.constant 0 : index
    %c112_86 = arith.constant 112 : index
    %146 = vector.load %arg11[%c0_85, %c112_86] : memref<8x512xf32, #tpu.memory_space<vmem>>, vector<8x256xf32>
    %147 = vector.extract_strided_slice %146 {offsets = [0, 0], sizes = [4, 256], strides = [1, 1]} : vector<8x256xf32> to vector<4x256xf32>
    %c4_87 = arith.constant 4 : index
    %c0_88 = arith.constant 0 : index
    %148 = vector.load %arg12[%c4_87, %c0_88] : memref<36x512xf32, #tpu.memory_space<vmem>>, vector<4x256xf32>
    tpu.vector_store %arg12[%c4_87, %c0_88], %147 {strides = array<i32>} : memref<36x512xf32, #tpu.memory_space<vmem>>, vector<4x256xf32>,
    %149 = vector.extract_strided_slice %146 {offsets = [4, 0], sizes = [4, 256], strides = [1, 1]} : vector<8x256xf32> to vector<4x256xf32>
    %c4_89 = arith.constant 4 : index
    %c256_90 = arith.constant 256 : index
    %150 = vector.load %arg12[%c4_89, %c256_90] : memref<36x512xf32, #tpu.memory_space<vmem>>, vector<4x256xf32>
    tpu.vector_store %arg12[%c4_89, %c256_90], %149 {strides = array<i32>} : memref<36x512xf32, #tpu.memory_space<vmem>>, vector<4x256xf32>,
    %c0_91 = arith.constant 0 : index
    %c113_92 = arith.constant 113 : index
    %151 = vector.load %arg11[%c0_91, %c113_92] : memref<8x512xf32, #tpu.memory_space<vmem>>, vector<8x256xf32>
    %cst_93 = arith.constant 0.000000e+00 : f32
    %152 = vector.shape_cast %22 : vector<1x256xi1> to vector<1x256xi1>
    %153 = vector.broadcast %152 : vector<1x256xi1> to vector<8x256xi1>
    %154 = vector.broadcast %cst_93 : f32 to vector<8x256xf32>
    %155 = arith.select %153, %151, %154 : vector<8x256xi1>, vector<8x256xf32>
    %156 = vector.extract_strided_slice %155 {offsets = [0, 0], sizes = [4, 256], strides = [1, 1]} : vector<8x256xf32> to vector<4x256xf32>
    %c8_94 = arith.constant 8 : index
    %c0_95 = arith.constant 0 : index
    %157 = vector.load %arg12[%c8_94, %c0_95] : memref<36x512xf32, #tpu.memory_space<vmem>>, vector<4x256xf32>
    tpu.vector_store %arg12[%c8_94, %c0_95], %156 {strides = array<i32>} : memref<36x512xf32, #tpu.memory_space<vmem>>, vector<4x256xf32>,
    %158 = vector.extract_strided_slice %155 {offsets = [4, 0], sizes = [4, 256], strides = [1, 1]} : vector<8x256xf32> to vector<4x256xf32>
    %c8_96 = arith.constant 8 : index
    %c256_97 = arith.constant 256 : index
    %159 = vector.load %arg12[%c8_96, %c256_97] : memref<36x512xf32, #tpu.memory_space<vmem>>, vector<4x256xf32>
    tpu.vector_store %arg12[%c8_96, %c256_97], %158 {strides = array<i32>} : memref<36x512xf32, #tpu.memory_space<vmem>>, vector<4x256xf32>,
    %c0_98 = arith.constant 0 : index
    %c127_99 = arith.constant 127 : index
    %160 = vector.load %arg11[%c0_98, %c127_99] : memref<8x512xf32, #tpu.memory_space<vmem>>, vector<8x256xf32>
    %cst_100 = arith.constant 0.000000e+00 : f32
    %161 = vector.shape_cast %20 : vector<1x256xi1> to vector<1x256xi1>
    %162 = vector.broadcast %161 : vector<1x256xi1> to vector<8x256xi1>
    %163 = vector.broadcast %cst_100 : f32 to vector<8x256xf32>
    %164 = arith.select %162, %160, %163 : vector<8x256xi1>, vector<8x256xf32>
    %165 = vector.extract_strided_slice %164 {offsets = [0, 0], sizes = [4, 256], strides = [1, 1]} : vector<8x256xf32> to vector<4x256xf32>
    %c12_101 = arith.constant 12 : index
    %c0_102 = arith.constant 0 : index
    %166 = vector.load %arg12[%c12_101, %c0_102] : memref<36x512xf32, #tpu.memory_space<vmem>>, vector<4x256xf32>
    tpu.vector_store %arg12[%c12_101, %c0_102], %165 {strides = array<i32>} : memref<36x512xf32, #tpu.memory_space<vmem>>, vector<4x256xf32>,
    %167 = vector.extract_strided_slice %164 {offsets = [4, 0], sizes = [4, 256], strides = [1, 1]} : vector<8x256xf32> to vector<4x256xf32>
    %c12_103 = arith.constant 12 : index
    %c256_104 = arith.constant 256 : index
    %168 = vector.load %arg12[%c12_103, %c256_104] : memref<36x512xf32, #tpu.memory_space<vmem>>, vector<4x256xf32>
    tpu.vector_store %arg12[%c12_103, %c256_104], %167 {strides = array<i32>} : memref<36x512xf32, #tpu.memory_space<vmem>>, vector<4x256xf32>,
    %c0_105 = arith.constant 0 : index
    %c128_106 = arith.constant 128 : index
    %169 = vector.load %arg11[%c0_105, %c128_106] : memref<8x512xf32, #tpu.memory_space<vmem>>, vector<8x256xf32>
    %170 = vector.extract_strided_slice %169 {offsets = [0, 0], sizes = [4, 256], strides = [1, 1]} : vector<8x256xf32> to vector<4x256xf32>
    %c16_107 = arith.constant 16 : index
    %c0_108 = arith.constant 0 : index
    %171 = vector.load %arg12[%c16_107, %c0_108] : memref<36x512xf32, #tpu.memory_space<vmem>>, vector<4x256xf32>
    tpu.vector_store %arg12[%c16_107, %c0_108], %170 {strides = array<i32>} : memref<36x512xf32, #tpu.memory_space<vmem>>, vector<4x256xf32>,
    %172 = vector.extract_strided_slice %169 {offsets = [4, 0], sizes = [4, 256], strides = [1, 1]} : vector<8x256xf32> to vector<4x256xf32>
    %c16_109 = arith.constant 16 : index
    %c256_110 = arith.constant 256 : index
    %173 = vector.load %arg12[%c16_109, %c256_110] : memref<36x512xf32, #tpu.memory_space<vmem>>, vector<4x256xf32>
    tpu.vector_store %arg12[%c16_109, %c256_110], %172 {strides = array<i32>} : memref<36x512xf32, #tpu.memory_space<vmem>>, vector<4x256xf32>,
    %c0_111 = arith.constant 0 : index
    %c129_112 = arith.constant 129 : index
    %174 = vector.load %arg11[%c0_111, %c129_112] : memref<8x512xf32, #tpu.memory_space<vmem>>, vector<8x256xf32>
    %cst_113 = arith.constant 0.000000e+00 : f32
    %175 = vector.shape_cast %22 : vector<1x256xi1> to vector<1x256xi1>
    %176 = vector.broadcast %175 : vector<1x256xi1> to vector<8x256xi1>
    %177 = vector.broadcast %cst_113 : f32 to vector<8x256xf32>
    %178 = arith.select %176, %174, %177 : vector<8x256xi1>, vector<8x256xf32>
    %179 = vector.extract_strided_slice %178 {offsets = [0, 0], sizes = [4, 256], strides = [1, 1]} : vector<8x256xf32> to vector<4x256xf32>
    %c20_114 = arith.constant 20 : index
    %c0_115 = arith.constant 0 : index
    %180 = vector.load %arg12[%c20_114, %c0_115] : memref<36x512xf32, #tpu.memory_space<vmem>>, vector<4x256xf32>
    tpu.vector_store %arg12[%c20_114, %c0_115], %179 {strides = array<i32>} : memref<36x512xf32, #tpu.memory_space<vmem>>, vector<4x256xf32>,
    %181 = vector.extract_strided_slice %178 {offsets = [4, 0], sizes = [4, 256], strides = [1, 1]} : vector<8x256xf32> to vector<4x256xf32>
    %c20_116 = arith.constant 20 : index
    %c256_117 = arith.constant 256 : index
    %182 = vector.load %arg12[%c20_116, %c256_117] : memref<36x512xf32, #tpu.memory_space<vmem>>, vector<4x256xf32>
    tpu.vector_store %arg12[%c20_116, %c256_117], %181 {strides = array<i32>} : memref<36x512xf32, #tpu.memory_space<vmem>>, vector<4x256xf32>,
    %c0_118 = arith.constant 0 : index
    %c143_119 = arith.constant 143 : index
    %183 = vector.load %arg11[%c0_118, %c143_119] : memref<8x512xf32, #tpu.memory_space<vmem>>, vector<8x256xf32>
    %cst_120 = arith.constant 0.000000e+00 : f32
    %184 = vector.shape_cast %20 : vector<1x256xi1> to vector<1x256xi1>
    %185 = vector.broadcast %184 : vector<1x256xi1> to vector<8x256xi1>
    %186 = vector.broadcast %cst_120 : f32 to vector<8x256xf32>
    %187 = arith.select %185, %183, %186 : vector<8x256xi1>, vector<8x256xf32>
    %188 = vector.extract_strided_slice %187 {offsets = [0, 0], sizes = [4, 256], strides = [1, 1]} : vector<8x256xf32> to vector<4x256xf32>
    %c24_121 = arith.constant 24 : index
    %c0_122 = arith.constant 0 : index
    %189 = vector.load %arg12[%c24_121, %c0_122] : memref<36x512xf32, #tpu.memory_space<vmem>>, vector<4x256xf32>
    tpu.vector_store %arg12[%c24_121, %c0_122], %188 {strides = array<i32>} : memref<36x512xf32, #tpu.memory_space<vmem>>, vector<4x256xf32>,
    %190 = vector.extract_strided_slice %187 {offsets = [4, 0], sizes = [4, 256], strides = [1, 1]} : vector<8x256xf32> to vector<4x256xf32>
    %c24_123 = arith.constant 24 : index
    %c256_124 = arith.constant 256 : index
    %191 = vector.load %arg12[%c24_123, %c256_124] : memref<36x512xf32, #tpu.memory_space<vmem>>, vector<4x256xf32>
    tpu.vector_store %arg12[%c24_123, %c256_124], %190 {strides = array<i32>} : memref<36x512xf32, #tpu.memory_space<vmem>>, vector<4x256xf32>,
    %c0_125 = arith.constant 0 : index
    %c144_126 = arith.constant 144 : index
    %192 = vector.load %arg11[%c0_125, %c144_126] : memref<8x512xf32, #tpu.memory_space<vmem>>, vector<8x256xf32>
    %193 = vector.extract_strided_slice %192 {offsets = [0, 0], sizes = [4, 256], strides = [1, 1]} : vector<8x256xf32> to vector<4x256xf32>
    %c28_127 = arith.constant 28 : index
    %c0_128 = arith.constant 0 : index
    %194 = vector.load %arg12[%c28_127, %c0_128] : memref<36x512xf32, #tpu.memory_space<vmem>>, vector<4x256xf32>
    tpu.vector_store %arg12[%c28_127, %c0_128], %193 {strides = array<i32>} : memref<36x512xf32, #tpu.memory_space<vmem>>, vector<4x256xf32>,
    %195 = vector.extract_strided_slice %192 {offsets = [4, 0], sizes = [4, 256], strides = [1, 1]} : vector<8x256xf32> to vector<4x256xf32>
    %c28_129 = arith.constant 28 : index
    %c256_130 = arith.constant 256 : index
    %196 = vector.load %arg12[%c28_129, %c256_130] : memref<36x512xf32, #tpu.memory_space<vmem>>, vector<4x256xf32>
    tpu.vector_store %arg12[%c28_129, %c256_130], %195 {strides = array<i32>} : memref<36x512xf32, #tpu.memory_space<vmem>>, vector<4x256xf32>,
    %c0_131 = arith.constant 0 : index
    %c145_132 = arith.constant 145 : index
    %197 = vector.load %arg11[%c0_131, %c145_132] : memref<8x512xf32, #tpu.memory_space<vmem>>, vector<8x256xf32>
    %cst_133 = arith.constant 0.000000e+00 : f32
    %198 = vector.shape_cast %22 : vector<1x256xi1> to vector<1x256xi1>
    %199 = vector.broadcast %198 : vector<1x256xi1> to vector<8x256xi1>
    %200 = vector.broadcast %cst_133 : f32 to vector<8x256xf32>
    %201 = arith.select %199, %197, %200 : vector<8x256xi1>, vector<8x256xf32>
    %202 = vector.extract_strided_slice %201 {offsets = [0, 0], sizes = [4, 256], strides = [1, 1]} : vector<8x256xf32> to vector<4x256xf32>
    %c32_134 = arith.constant 32 : index
    %c0_135 = arith.constant 0 : index
    %203 = vector.load %arg12[%c32_134, %c0_135] : memref<36x512xf32, #tpu.memory_space<vmem>>, vector<4x256xf32>
    tpu.vector_store %arg12[%c32_134, %c0_135], %202 {strides = array<i32>} : memref<36x512xf32, #tpu.memory_space<vmem>>, vector<4x256xf32>,
    %204 = vector.extract_strided_slice %201 {offsets = [4, 0], sizes = [4, 256], strides = [1, 1]} : vector<8x256xf32> to vector<4x256xf32>
    %c32_136 = arith.constant 32 : index
    %c256_137 = arith.constant 256 : index
    %205 = vector.load %arg12[%c32_136, %c256_137] : memref<36x512xf32, #tpu.memory_space<vmem>>, vector<4x256xf32>
    tpu.vector_store %arg12[%c32_136, %c256_137], %204 {strides = array<i32>} : memref<36x512xf32, #tpu.memory_space<vmem>>, vector<4x256xf32>,
    %c0_138 = arith.constant 0 : index
    %c0_139 = arith.constant 0 : index
    %206 = vector.load %arg6[%c0_138, %c0_139] : memref<4x36xf32, #tpu.memory_space<vmem>>, vector<4x36xf32>
    %c0_140 = arith.constant 0 : index
    %c0_141 = arith.constant 0 : index
    %207 = vector.load %arg12[%c0_140, %c0_141] : memref<36x512xf32, #tpu.memory_space<vmem>>, vector<36x512xf32>
    %cst_142 = arith.constant dense<0.000000e+00> : vector<4x512xf32>
    %208 = tpu.matmul %206, %207, %cst_142 {dimension_numbers = #tpu.dot_dimension_numbers<[1], [0], [0], [1], [0, 0, 1, 1], [], []>} : vector<4x36xf32>, vector<36x512xf32>, vector<4x512xf32> -> vector<4x512xf32>
    %c0_143 = arith.constant 0 : index
    %c0_144 = arith.constant 0 : index
    %209 = vector.load %arg7[%c0_143, %c0_144] : memref<4x1xf32, #tpu.memory_space<vmem>>, vector<4x1xf32>
    %210 = vector.broadcast %209 : vector<4x1xf32> to vector<4x512xf32>
    %211 = arith.addf %208, %210 : vector<4x512xf32>
    %cst_145 = arith.constant dense<0.000000e+00> : vector<4xf32>
    %212 = vector.multi_reduction <add>, %211, %cst_145 [1] : vector<4x512xf32> to vector<4xf32>
    %213 = vector.shape_cast %212 : vector<4xf32> to vector<4x1xf32>
    %cst_146 = arith.constant 0.001953125 : f32
    %214 = vector.broadcast %cst_146 : f32 to vector<4x1xf32>
    %215 = arith.mulf %213, %214 : vector<4x1xf32>
    %216 = arith.mulf %211, %211 : vector<4x512xf32>
    %cst_147 = arith.constant dense<0.000000e+00> : vector<4xf32>
    %217 = vector.multi_reduction <add>, %216, %cst_147 [1] : vector<4x512xf32> to vector<4xf32>
    %218 = vector.shape_cast %217 : vector<4xf32> to vector<4x1xf32>
    %cst_148 = arith.constant 0.001953125 : f32
    %219 = vector.broadcast %cst_148 : f32 to vector<4x1xf32>
    %220 = arith.mulf %218, %219 : vector<4x1xf32>
    %221 = arith.mulf %215, %215 : vector<4x1xf32>
    %222 = arith.subf %220, %221 : vector<4x1xf32>
    %c0_149 = arith.constant 0 : index
    %c0_150 = arith.constant 0 : index
    %223 = vector.load %arg8[%c0_149, %c0_150] : memref<4x1xf32, #tpu.memory_space<vmem>>, vector<4x1xf32>
    %cst_151 = arith.constant 8.000000e-01 : f32
    %224 = vector.broadcast %cst_151 : f32 to vector<4x1xf32>
    %225 = arith.addf %222, %224 : vector<4x1xf32>
    %226 = math.rsqrt %225 : vector<4x1xf32>
    %227 = arith.mulf %223, %226 : vector<4x1xf32>
    %c0_152 = arith.constant 0 : index
    %c0_153 = arith.constant 0 : index
    %228 = vector.load %arg9[%c0_152, %c0_153] : memref<4x1xf32, #tpu.memory_space<vmem>>, vector<4x1xf32>
    %229 = arith.mulf %215, %227 : vector<4x1xf32>
    %230 = arith.subf %228, %229 : vector<4x1xf32>
    %c0_154 = arith.constant 0 : index
    %c0_155 = arith.constant 0 : index
    %c0_156 = arith.constant 0 : index
    %231 = vector.load %arg0[%c0_154, %c0_155, %c0_156] : memref<2x4x256xf32, #tpu.memory_space<vmem>>, vector<1x4x256xf32>
    %232 = vector.shape_cast %231 : vector<1x4x256xf32> to vector<4x256xf32>
    %233 = vector.extract_strided_slice %211 {offsets = [0, 0], sizes = [4, 256], strides = [1, 1]} : vector<4x512xf32> to vector<4x256xf32>
    %234 = vector.broadcast %227 : vector<4x1xf32> to vector<4x256xf32>
    %235 = arith.mulf %233, %234 : vector<4x256xf32>
    %236 = arith.addf %232, %235 : vector<4x256xf32>
    %237 = vector.broadcast %230 : vector<4x1xf32> to vector<4x256xf32>
    %238 = arith.addf %236, %237 : vector<4x256xf32>
    %c0_157 = arith.constant 0 : index
    %c0_158 = arith.constant 0 : index
    %c0_159 = arith.constant 0 : index
    %239 = vector.load %arg10[%c0_157, %c0_158, %c0_159] : memref<2x4x256xf32, #tpu.memory_space<vmem>>, vector<1x4x256xf32>
    %240 = vector.shape_cast %239 : vector<1x4x256xf32> to vector<4x256xf32>
    %241 = vector.shape_cast %238 : vector<4x256xf32> to vector<1x4x256xf32>
    tpu.vector_store %arg10[%c0_157, %c0_158, %c0_159], %241 {strides = array<i32>} : memref<2x4x256xf32, #tpu.memory_space<vmem>>, vector<1x4x256xf32>,
    %c1_160 = arith.constant 1 : index
    %c0_161 = arith.constant 0 : index
    %c0_162 = arith.constant 0 : index
    %242 = vector.load %arg0[%c1_160, %c0_161, %c0_162] : memref<2x4x256xf32, #tpu.memory_space<vmem>>, vector<1x4x256xf32>
    %243 = vector.shape_cast %242 : vector<1x4x256xf32> to vector<4x256xf32>
    %244 = vector.extract_strided_slice %211 {offsets = [0, 256], sizes = [4, 256], strides = [1, 1]} : vector<4x512xf32> to vector<4x256xf32>
    %245 = vector.broadcast %227 : vector<4x1xf32> to vector<4x256xf32>
    %246 = arith.mulf %244, %245 : vector<4x256xf32>
    %247 = arith.addf %243, %246 : vector<4x256xf32>
    %248 = vector.broadcast %230 : vector<4x1xf32> to vector<4x256xf32>
    %249 = arith.addf %247, %248 : vector<4x256xf32>
    %c1_163 = arith.constant 1 : index
    %c0_164 = arith.constant 0 : index
    %c0_165 = arith.constant 0 : index
    %250 = vector.load %arg10[%c1_163, %c0_164, %c0_165] : memref<2x4x256xf32, #tpu.memory_space<vmem>>, vector<1x4x256xf32>
    %251 = vector.shape_cast %250 : vector<1x4x256xf32> to vector<4x256xf32>
    %252 = vector.shape_cast %249 : vector<4x256xf32> to vector<1x4x256xf32>
    tpu.vector_store %arg10[%c1_163, %c0_164, %c0_165], %252 {strides = array<i32>} : memref<2x4x256xf32, #tpu.memory_space<vmem>>, vector<1x4x256xf32>,
    return
  }
}

</mosaic_0001>

<llo_original>
// kernel: tpu_custom_call.1
$region0: #{tpu_custom_call.1}
  #allocation0 [shape = 'u32[]', space=smem, size = 0x4, offset = 0x4, fixed_abs, tag = 'smem constant byte address 0x4 - core index']
  #allocation1 [shape = 'u32[72,128]{1,0:T(1,128)}', space=vmem, size = 0x9000, scoped, tag = 'internal scratch']
  #allocation2 [shape = 'f32[8,512]{1,0:T(8,128)}', space=vmem, size = 0x4000, scoped, tag = 'scratch operand']
  #allocation3 [shape = 'f32[36,512]{1,0:T(8,128)}', space=vmem, size = 0x14000, scoped, tag = 'scratch operand']
  #allocation4 [shape = 'f32[1]{0:T(128)S(6)}', space=smem, size = 0x200, scoped, tag = 'scoped memory for tpu_custom_call.1']
  %s0 = inlined_call_operand.vmem [shape: f32[2,4,256], index: 0, kind: input, shape index: {}]
  %s1 = inlined_call_operand.vmem [shape: f32[4,36], index: 1, kind: input, shape index: {}]
  %s2 = inlined_call_operand.vmem [shape: f32[4,1], index: 2, kind: input, shape index: {}]
  %s3 = inlined_call_operand.vmem [shape: f32[4,1], index: 3, kind: input, shape index: {}]
  %s4 = inlined_call_operand.vmem [shape: f32[4,1], index: 4, kind: input, shape index: {}]
  %s5 = inlined_call_operand.<no memory space> [shape: f32[1], index: 5, kind: input, shape index: {}]
  %s6 = inlined_call_operand.vmem [shape: f32[4,36], index: 6, kind: input, shape index: {}]
  %s7 = inlined_call_operand.vmem [shape: f32[4,1], index: 7, kind: input, shape index: {}]
  %s8 = inlined_call_operand.vmem [shape: f32[4,1], index: 8, kind: input, shape index: {}]
  %s9 = inlined_call_operand.vmem [shape: f32[4,1], index: 9, kind: input, shape index: {}]
  %s10 = inlined_call_operand.hbm [shape: f32[2,4,256], index: 10, kind: output, shape index: {}]
  %s11 = sld [smem:[#allocation0]]
  $region50: #{tpu_custom_call.1} parent=0
    _
  %s13 = ssub.s32 1, %s11
  %s14 = scalar_select 0, %s13, %s11
  %15 = sst [smem:[#allocation4]] %s5
  $region1: #{tpu_custom_call.1} parent=0
    #allocation5 [shape = 'u8[8192]{0}', space=vmem, size = 0x2000, scoped, tag = 'output window, operand 0, single buffered']
    #allocation6 [shape = 's32[1]{0}', space=sflag, size = 0x4, scoped, tag = 'scoped memory for tpu_custom_call.1']
    %16 = vsyncpa [#allocation6], 0
    // Predicated region
    $region2: #{tpu_custom_call.1} parent=1 // pred_check
      _
    $region3: #{tpu_custom_call.1} parent=1 // pred_check_branch
      %18 = sbr.rel (0) target = $region5
    $region4: #{tpu_custom_call.1} parent=1 // pred_region
      _
    $region5: #{tpu_custom_call.1} parent=1 // pred_fallthru
      _
    // Predicated region
    $region6: #{tpu_custom_call.1} parent=1 // pred_check
      _
    $region7: #{tpu_custom_call.1} parent=1 // pred_check_branch
      %20 = sbr.rel (0) target = $region9
    $region8: #{tpu_custom_call.1} parent=1 // pred_region
      _
    $region9: #{tpu_custom_call.1} parent=1 // pred_fallthru
      _
    // Predicated region
    $region10: #{tpu_custom_call.1} parent=1 // pred_check
      _
    $region11: #{tpu_custom_call.1} parent=1 // pred_check_branch
      %22 = sbr.rel (0) target = $region13
    $region12: #{tpu_custom_call.1} parent=1 // pred_region
      _
    $region13: #{tpu_custom_call.1} parent=1 // pred_fallthru
      _
    // Predicated region
    $region14: #{tpu_custom_call.1} parent=1 // pred_check
      _
    $region15: #{tpu_custom_call.1} parent=1 // pred_check_branch
      %24 = sbr.rel (0) target = $region17
    $region16: #{tpu_custom_call.1} parent=1 // pred_region
      _
    $region17: #{tpu_custom_call.1} parent=1 // pred_fallthru
      _
    // Predicated region
    $region18: #{tpu_custom_call.1} parent=1 // pred_check
      _
    $region19: #{tpu_custom_call.1} parent=1 // pred_check_branch
      %26 = sbr.rel (0) target = $region21
    $region20: #{tpu_custom_call.1} parent=1 // pred_region
      _
    $region21: #{tpu_custom_call.1} parent=1 // pred_fallthru
      _
    // Predicated region
    $region22: #{tpu_custom_call.1} parent=1 // pred_check
      _
    $region23: #{tpu_custom_call.1} parent=1 // pred_check_branch
      %28 = sbr.rel (0) target = $region25
    $region24: #{tpu_custom_call.1} parent=1 // pred_region
      _
    $region25: #{tpu_custom_call.1} parent=1 // pred_fallthru
      _
    // Predicated region
    $region26: #{tpu_custom_call.1} parent=1 // pred_check
      _
    $region27: #{tpu_custom_call.1} parent=1 // pred_check_branch
      %30 = sbr.rel (0) target = $region29
    $region28: #{tpu_custom_call.1} parent=1 // pred_region
      _
    $region29: #{tpu_custom_call.1} parent=1 // pred_fallthru
      _
    // Predicated region
    $region30: #{tpu_custom_call.1} parent=1 // pred_check
      _
    $region31: #{tpu_custom_call.1} parent=1 // pred_check_branch
      %32 = sbr.rel (0) target = $region33
    $region32: #{tpu_custom_call.1} parent=1 // pred_region
      _
    $region33: #{tpu_custom_call.1} parent=1 // pred_fallthru
      _
    // Predicated region
    $region34: #{tpu_custom_call.1} parent=1 // pred_check
      _
    $region35: #{tpu_custom_call.1} parent=1 // pred_check_branch
      %34 = sbr.rel (0) target = $region37
    $region36: #{tpu_custom_call.1} parent=1 // pred_region
      _
    $region37: #{tpu_custom_call.1} parent=1 // pred_fallthru
      _
    // Predicated region
    $region38: #{tpu_custom_call.1} parent=1 // pred_check
      _
    $region39: #{tpu_custom_call.1} parent=1 // pred_check_branch
      %36 = sbr.rel (0) target = $region41
    $region40: #{tpu_custom_call.1} parent=1 // pred_region
      _
    $region41: #{tpu_custom_call.1} parent=1 // pred_fallthru
      _
    %37 = vst [vmem:[#allocation2] sm:$0xff] 0.0
    %38 = vst [vmem:[#allocation2 + $0x8] sm:$0xff] 0.0
    %39 = vst [vmem:[#allocation2 + $0x10] sm:$0xff] 0.0
    %40 = vst [vmem:[#allocation2 + $0x18] sm:$0xff] 0.0
    %v41 = vlaneseq
    %v42 = vand.u32 %v41, 127
    %v43 = vadd.s32 %v42, 128
    %vm44 = vcmp.lt.s32.totalorder %v42, 0
    %v45 = vsub.s32 0, %v42
    %v46 = vsel %vm44, %v45, %v42
    %v47 = vshrl.u32 %v46, 4
    %v48 = vand.u32 %v46, 15
    %v49 = vsub.s32 0, %v48
    %v50 = vsel %vm44, %v49, %v48
    %vm51 = vcmp.lt.s32.totalorder %v43, 0
    %v52 = vsub.s32 0, %v43
    %v53 = vsel %vm51, %v52, %v43
    %v54 = vshrl.u32 %v53, 4
    %v55 = vand.u32 %v53, 15
    %v56 = vsub.s32 0, %v55
    %v57 = vsel %vm51, %v56, %v55
    %vm58 = vcmp.ne.s32.totalorder %v50, 0
    %vm59 = vcmp.ne.s32.totalorder %v57, 0
    %vm60 = vcmp.lt.s32.totalorder %v50, 0
    %vm61 = vcmp.lt.s32.totalorder %v57, 0
    %vm62 = vmand %vm60, %vm58
    %vm63 = vmand %vm61, %vm59
    %v64 = vadd.s32 %v50, 16
    %v65 = vadd.s32 %v57, 16
    %v66 = vsel %vm62, %v64, %v50
    %v67 = vsel %vm63, %v65, %v57
    %vm68 = vcmp.ge.s32.totalorder %v66, 1
    %vm69 = vcmp.ge.s32.totalorder %v67, 1
    %vm70 = vcmp.le.s32.totalorder %v66, 14
    %vm71 = vcmp.le.s32.totalorder %v67, 14
    %v72 = vld [vmem:[%s0] sm:$0xff]
    %74 = vst [vmem:[#allocation1] ss:$2 sm:$0xff] %v72
    %v75 = vld.sshfl [vmem:[#allocation1] sm:$0xff pattern:$0x75316420]
    %v76 = vld.sshfl [vmem:[#allocation1 + $0x8] sm:$0xff pattern:$0x75316420]
    %79 = vst [vmem:[#allocation2 + $0x8] sm:$0xf] %v75
    %80 = vst [vmem:[#allocation2 + $0x10] sm:$0xf] %v76
    %s81 = scalar_lea.vmem %s0, 8
    %v82 = vld [vmem:[%s81] sm:$0xff]
    %s84 = scalar_lea.vmem [#allocation1], 1
    %85 = vst [vmem:[%s84] ss:$2 sm:$0xff] %v82
    %v86 = vld.sshfl [vmem:[#allocation1] sm:$0xff pattern:$0x75316420]
    %v87 = vld.sshfl [vmem:[#allocation1 + $0x8] sm:$0xff pattern:$0x75316420]
    %90 = vst [vmem:[#allocation2 + $0x8] sm:$0xf0] %v86
    %91 = vst [vmem:[#allocation2 + $0x10] sm:$0xf0] %v87
    %v92 = vld [vmem:[#allocation2] sm:$0xff]
    %v93 = vld [vmem:[#allocation2 + $0x8] sm:$0xff]
    %v94 = vld [vmem:[#allocation2 + $0x10] sm:$0xff]
    %v95 = vsel %vm68, 1, 0
    %v96 = vsel %vm69, 1, 0
    %vm97 = vcmp.eq.s32.totalorder %v95, 1
    %vm98 = vcmp.eq.s32.totalorder %v96, 1
    %102 = vrot.lane.b32.xlu0 %v92, 17
    %v103 = vpop.permute.xlu0 %102
    %104 = vrot.lane.b32.xlu0 %v93, 17
    %v105 = vpop.permute.xlu0 %104
    %106 = vrot.lane.b32.xlu0 %v94, 17
    %v107 = vpop.permute.xlu0 %106
    %vm108 = vcmask 138240
    %v109 = vsel %vm108, %v103, %v105
    %v110 = vsel %vm108, %v105, %v107
    %v113 = vsel %vm97, %v109, 0.0
    %v114 = vsel %vm98, %v110, 0.0
    %115 = vst [vmem:[#allocation3] sm:$0xf] %v113
    %116 = vst [vmem:[#allocation3 + $0x8] sm:$0xf] %v114
    %v119 = vrot.slane %v113, 4
    %v120 = vrot.slane %v114, 4
    %123 = vst [vmem:[#allocation3 + $0x10] sm:$0xf] %v119
    %124 = vst [vmem:[#allocation3 + $0x18] sm:$0xf] %v120
    %v125 = vld [vmem:[#allocation2] sm:$0xff]
    %v126 = vld [vmem:[#allocation2 + $0x8] sm:$0xff]
    %v127 = vld [vmem:[#allocation2 + $0x10] sm:$0xff]
    %v131 = vrot.slane %v125, 4
    %v132 = vrot.slane %v126, 4
    %v133 = vrot.slane %v127, 4
    %134 = vrot.lane.b32.xlu0 %v131, 16
    %v135 = vpop.permute.xlu0 %134
    %136 = vrot.lane.b32.xlu0 %v132, 16
    %v137 = vpop.permute.xlu0 %136
    %138 = vrot.lane.b32.xlu0 %v133, 16
    %v139 = vpop.permute.xlu0 %138
    %vm140 = vcmask 130048
    %v141 = vsel %vm140, %v135, %v137
    %v142 = vsel %vm140, %v137, %v139
    %145 = vst [vmem:[#allocation3] sm:$0xf0] %v141
    %146 = vst [vmem:[#allocation3 + $0x8] sm:$0xf0] %v142
    %147 = vrot.lane.b32.xlu0 %v125, 16
    %v148 = vpop.permute.xlu0 %147
    %149 = vrot.lane.b32.xlu0 %v126, 16
    %v150 = vpop.permute.xlu0 %149
    %151 = vrot.lane.b32.xlu0 %v127, 16
    %v152 = vpop.permute.xlu0 %151
    %v153 = vsel %vm140, %v148, %v150
    %v154 = vsel %vm140, %v150, %v152
    %157 = vst [vmem:[#allocation3 + $0x10] sm:$0xf0] %v153
    %158 = vst [vmem:[#allocation3 + $0x18] sm:$0xf0] %v154
    %v159 = vld [vmem:[#allocation2] sm:$0xff]
    %v160 = vld [vmem:[#allocation2 + $0x8] sm:$0xff]
    %v161 = vld [vmem:[#allocation2 + $0x10] sm:$0xff]
    %v162 = vsel %vm70, 1, 0
    %v163 = vsel %vm71, 1, 0
    %vm164 = vcmp.eq.s32.totalorder %v162, 1
    %vm165 = vcmp.eq.s32.totalorder %v163, 1
    %169 = vrot.lane.b32.xlu0 %v159, 15
    %v170 = vpop.permute.xlu0 %169
    %171 = vrot.lane.b32.xlu0 %v160, 15
    %v172 = vpop.permute.xlu0 %171
    %173 = vrot.lane.b32.xlu0 %v161, 15
    %v174 = vpop.permute.xlu0 %173
    %vm175 = vcmask 121856
    %v176 = vsel %vm175, %v170, %v172
    %v177 = vsel %vm175, %v172, %v174
    %v180 = vsel %vm164, %v176, 0.0
    %v181 = vsel %vm165, %v177, 0.0
    %182 = vst [vmem:[#allocation3 + $0x20] sm:$0xf] %v180
    %183 = vst [vmem:[#allocation3 + $0x28] sm:$0xf] %v181
    %v186 = vrot.slane %v180, 4
    %v187 = vrot.slane %v181, 4
    %190 = vst [vmem:[#allocation3 + $0x30] sm:$0xf] %v186
    %191 = vst [vmem:[#allocation3 + $0x38] sm:$0xf] %v187
    %v192 = vld [vmem:[#allocation2] sm:$0xff]
    %v193 = vld [vmem:[#allocation2 + $0x8] sm:$0xff]
    %v194 = vld [vmem:[#allocation2 + $0x10] sm:$0xff]
    %198 = vrot.lane.b32.xlu0 %v192, 1
    %v199 = vpop.permute.xlu0 %198
    %200 = vrot.lane.b32.xlu0 %v193, 1
    %v201 = vpop.permute.xlu0 %200
    %202 = vrot.lane.b32.xlu0 %v194, 1
    %v203 = vpop.permute.xlu0 %202
    %vm204 = vcmask 7168
    %v205 = vsel %vm204, %v199, %v201
    %v206 = vsel %vm204, %v201, %v203
    %v209 = vsel %vm97, %v205, 0.0
    %v210 = vsel %vm98, %v206, 0.0
    %v213 = vrot.slane %v209, 4
    %v214 = vrot.slane %v210, 4
    %217 = vst [vmem:[#allocation3 + $0x20] sm:$0xf0] %v213
    %218 = vst [vmem:[#allocation3 + $0x28] sm:$0xf0] %v214
    %219 = vst [vmem:[#allocation3 + $0x30] sm:$0xf0] %v209
    %220 = vst [vmem:[#allocation3 + $0x38] sm:$0xf0] %v210
    %v221 = vld [vmem:[#allocation2 + $0x8] sm:$0xff]
    %v222 = vld [vmem:[#allocation2 + $0x10] sm:$0xff]
    %223 = vst [vmem:[#allocation3 + $0x40] sm:$0xf] %v221
    %224 = vst [vmem:[#allocation3 + $0x48] sm:$0xf] %v222
    %v227 = vrot.slane %v221, 4
    %v228 = vrot.slane %v222, 4
    %231 = vst [vmem:[#allocation3 + $0x50] sm:$0xf] %v227
    %232 = vst [vmem:[#allocation3 + $0x58] sm:$0xf] %v228
    %v233 = vld [vmem:[#allocation2 + $0x8] sm:$0xff]
    %v234 = vld [vmem:[#allocation2 + $0x10] sm:$0xff]
    %v235 = vld [vmem:[#allocation2 + $0x18] sm:$0xff]
    %239 = vrot.lane.b32.xlu0 %v233, 127
    %v240 = vpop.permute.xlu0 %239
    %241 = vrot.lane.b32.xlu0 %v234, 127
    %v242 = vpop.permute.xlu0 %241
    %243 = vrot.lane.b32.xlu0 %v235, 127
    %v244 = vpop.permute.xlu0 %243
    %vm245 = vcmask 1039360
    %v246 = vsel %vm245, %v240, %v242
    %v247 = vsel %vm245, %v242, %v244
    %v250 = vsel %vm164, %v246, 0.0
    %v251 = vsel %vm165, %v247, 0.0
    %v254 = vrot.slane %v250, 4
    %v255 = vrot.slane %v251, 4
    %258 = vst [vmem:[#allocation3 + $0x40] sm:$0xf0] %v254
    %259 = vst [vmem:[#allocation3 + $0x48] sm:$0xf0] %v255
    %260 = vst [vmem:[#allocation3 + $0x50] sm:$0xf0] %v250
    %261 = vst [vmem:[#allocation3 + $0x58] sm:$0xf0] %v251
    %v262 = vld [vmem:[#allocation2 + $0x8] sm:$0xff]
    %v263 = vld [vmem:[#allocation2 + $0x10] sm:$0xff]
    %v264 = vld [vmem:[#allocation2 + $0x18] sm:$0xff]
    %268 = vrot.lane.b32.xlu0 %v262, 113
    %v269 = vpop.permute.xlu0 %268
    %270 = vrot.lane.b32.xlu0 %v263, 113
    %v271 = vpop.permute.xlu0 %270
    %272 = vrot.lane.b32.xlu0 %v264, 113
    %v273 = vpop.permute.xlu0 %272
    %vm274 = vcmask 924672
    %v275 = vsel %vm274, %v269, %v271
    %v276 = vsel %vm274, %v271, %v273
    %v279 = vsel %vm97, %v275, 0.0
    %v280 = vsel %vm98, %v276, 0.0
    %281 = vst [vmem:[#allocation3 + $0x60] sm:$0xf] %v279
    %282 = vst [vmem:[#allocation3 + $0x68] sm:$0xf] %v280
    %v285 = vrot.slane %v279, 4
    %v286 = vrot.slane %v280, 4
    %289 = vst [vmem:[#allocation3 + $0x70] sm:$0xf] %v285
    %290 = vst [vmem:[#allocation3 + $0x78] sm:$0xf] %v286
    %v291 = vld [vmem:[#allocation2 + $0x8] sm:$0xff]
    %v292 = vld [vmem:[#allocation2 + $0x10] sm:$0xff]
    %v293 = vld [vmem:[#allocation2 + $0x18] sm:$0xff]
    %v297 = vrot.slane %v291, 4
    %v298 = vrot.slane %v292, 4
    %v299 = vrot.slane %v293, 4
    %300 = vrot.lane.b32.xlu0 %v297, 112
    %v301 = vpop.permute.xlu0 %300
    %302 = vrot.lane.b32.xlu0 %v298, 112
    %v303 = vpop.permute.xlu0 %302
    %304 = vrot.lane.b32.xlu0 %v299, 112
    %v305 = vpop.permute.xlu0 %304
    %vm306 = vcmask 916480
    %v307 = vsel %vm306, %v301, %v303
    %v308 = vsel %vm306, %v303, %v305
    %311 = vst [vmem:[#allocation3 + $0x60] sm:$0xf0] %v307
    %312 = vst [vmem:[#allocation3 + $0x68] sm:$0xf0] %v308
    %313 = vrot.lane.b32.xlu0 %v291, 112
    %v314 = vpop.permute.xlu0 %313
    %315 = vrot.lane.b32.xlu0 %v292, 112
    %v316 = vpop.permute.xlu0 %315
    %317 = vrot.lane.b32.xlu0 %v293, 112
    %v318 = vpop.permute.xlu0 %317
    %v319 = vsel %vm306, %v314, %v316
    %v320 = vsel %vm306, %v316, %v318
    %323 = vst [vmem:[#allocation3 + $0x70] sm:$0xf0] %v319
    %324 = vst [vmem:[#allocation3 + $0x78] sm:$0xf0] %v320
    %v325 = vld [vmem:[#allocation2 + $0x8] sm:$0xff]
    %v326 = vld [vmem:[#allocation2 + $0x10] sm:$0xff]
    %v327 = vld [vmem:[#allocation2 + $0x18] sm:$0xff]
    %331 = vrot.lane.b32.xlu0 %v325, 111
    %v332 = vpop.permute.xlu0 %331
    %333 = vrot.lane.b32.xlu0 %v326, 111
    %v334 = vpop.permute.xlu0 %333
    %335 = vrot.lane.b32.xlu0 %v327, 111
    %v336 = vpop.permute.xlu0 %335
    %vm337 = vcmask 908288
    %v338 = vsel %vm337, %v332, %v334
    %v339 = vsel %vm337, %v334, %v336
    %v342 = vsel %vm164, %v338, 0.0
    %v343 = vsel %vm165, %v339, 0.0
    %344 = vst [vmem:[#allocation3 + $0x80] sm:$0xf] %v342
    %345 = vst [vmem:[#allocation3 + $0x88] sm:$0xf] %v343
    %v348 = vrot.slane %v342, 4
    %v349 = vrot.slane %v343, 4
    %352 = vst [vmem:[#allocation3 + $0x90] sm:$0xf] %v348
    %353 = vst [vmem:[#allocation3 + $0x98] sm:$0xf] %v349
    %v354 = vld [vmem:[%s1] sm:$0xf]
    %v355 = vld [vmem:[#allocation3] sm:$0xff]
    %v356 = vld [vmem:[#allocation3 + $0x8] sm:$0xff]
    %v357 = vld [vmem:[#allocation3 + $0x10] sm:$0xff]
    %v358 = vld [vmem:[#allocation3 + $0x18] sm:$0xff]
    %v359 = vld [vmem:[#allocation3 + $0x20] sm:$0xff]
    %v360 = vld [vmem:[#allocation3 + $0x28] sm:$0xff]
    %v361 = vld [vmem:[#allocation3 + $0x30] sm:$0xff]
    %v362 = vld [vmem:[#allocation3 + $0x38] sm:$0xff]
    %v363 = vld [vmem:[#allocation3 + $0x40] sm:$0xff]
    %v364 = vld [vmem:[#allocation3 + $0x48] sm:$0xff]
    %v365 = vld [vmem:[#allocation3 + $0x50] sm:$0xff]
    %v366 = vld [vmem:[#allocation3 + $0x58] sm:$0xff]
    %v367 = vld [vmem:[#allocation3 + $0x60] sm:$0xff]
    %v368 = vld [vmem:[#allocation3 + $0x68] sm:$0xff]
    %v369 = vld [vmem:[#allocation3 + $0x70] sm:$0xff]
    %v370 = vld [vmem:[#allocation3 + $0x78] sm:$0xff]
    %v371 = vld [vmem:[#allocation3 + $0x80] sm:$0xf]
    %v372 = vld [vmem:[#allocation3 + $0x88] sm:$0xf]
    %v373 = vld [vmem:[#allocation3 + $0x90] sm:$0xf]
    %v374 = vld [vmem:[#allocation3 + $0x98] sm:$0xf]
    %v375 = vld [vmem:[%s2] sm:$0xf]
    %377 = vset.pattern.permute.xlu0 0
    %378 = vperm.xlu0 %377, %v375
    %v379 = vpop.permute.xlu0 %378
    %vm381 = vcmask 293888
    %v383 = vsel %vm381, %v354, 0
    %vm385 = vcmask 1043456
    %v387 = vsel %vm385, %v371, 0
    %v390 = vsel %vm385, %v372, 0
    %v393 = vsel %vm385, %v373, 0
    %v396 = vsel %vm385, %v374, 0
    %398 = vmatpush.msra.mxu0 0.0
    %399 = vmatpush.msra.mxu0 0.0
    %400 = vmatpush.msra.mxu0 0.0
    %401 = vmatpush.msra.mxu0 0.0
    %402 = vmatpush.msra.mxu0 0.0
    %403 = vmatpush.msra.mxu0 0.0
    %404 = vmatpush.msra.mxu0 0.0
    %405 = vmatpush.msra.mxu0 0.0
    %406 = vmatpush.msra.mxu0 0.0
    %407 = vmatpush.msra.mxu0 0.0
    %408 = vmatpush.msra.mxu0 0.0
    %409 = vmatpush.msra.mxu0 %v387
    %410 = vmatpush.msra.mxu0 %v367
    %411 = vmatpush.msra.mxu0 %v363
    %412 = vmatpush.msra.mxu0 %v359
    %413 = vmatpush.msra.mxu0 %v355
    %414 = vmatmul.f32.gmra.mxu0 %v383
    %v415 = vpop.f32.mrf.mxu0
    %v416 = vadd.f32 %v379, %v415
    %417 = vdwg.mxu0
    %418 = vmatpush.msra.mxu0 0.0
    %419 = vmatpush.msra.mxu0 0.0
    %420 = vmatpush.msra.mxu0 0.0
    %421 = vmatpush.msra.mxu0 0.0
    %422 = vmatpush.msra.mxu0 0.0
    %423 = vmatpush.msra.mxu0 0.0
    %424 = vmatpush.msra.mxu0 0.0
    %425 = vmatpush.msra.mxu0 0.0
    %426 = vmatpush.msra.mxu0 0.0
    %427 = vmatpush.msra.mxu0 0.0
    %428 = vmatpush.msra.mxu0 0.0
    %429 = vmatpush.msra.mxu0 %v390
    %430 = vmatpush.msra.mxu0 %v368
    %431 = vmatpush.msra.mxu0 %v364
    %432 = vmatpush.msra.mxu0 %v360
    %433 = vmatpush.msra.mxu0 %v356
    %434 = vmatmul.f32.gmra.mxu0 %v383
    %v435 = vpop.f32.mrf.mxu0
    %v436 = vadd.f32 %v379, %v435
    %437 = vdwg.mxu0
    %438 = vmatpush.msra.mxu0 0.0
    %439 = vmatpush.msra.mxu0 0.0
    %440 = vmatpush.msra.mxu0 0.0
    %441 = vmatpush.msra.mxu0 0.0
    %442 = vmatpush.msra.mxu0 0.0
    %443 = vmatpush.msra.mxu0 0.0
    %444 = vmatpush.msra.mxu0 0.0
    %445 = vmatpush.msra.mxu0 0.0
    %446 = vmatpush.msra.mxu0 0.0
    %447 = vmatpush.msra.mxu0 0.0
    %448 = vmatpush.msra.mxu0 0.0
    %449 = vmatpush.msra.mxu0 %v393
    %450 = vmatpush.msra.mxu0 %v369
    %451 = vmatpush.msra.mxu0 %v365
    %452 = vmatpush.msra.mxu0 %v361
    %453 = vmatpush.msra.mxu0 %v357
    %454 = vmatmul.f32.gmra.mxu0 %v383
    %v455 = vpop.f32.mrf.mxu0
    %v456 = vadd.f32 %v379, %v455
    %457 = vdwg.mxu0
    %458 = vmatpush.msra.mxu0 0.0
    %459 = vmatpush.msra.mxu0 0.0
    %460 = vmatpush.msra.mxu0 0.0
    %461 = vmatpush.msra.mxu0 0.0
    %462 = vmatpush.msra.mxu0 0.0
    %463 = vmatpush.msra.mxu0 0.0
    %464 = vmatpush.msra.mxu0 0.0
    %465 = vmatpush.msra.mxu0 0.0
    %466 = vmatpush.msra.mxu0 0.0
    %467 = vmatpush.msra.mxu0 0.0
    %468 = vmatpush.msra.mxu0 0.0
    %469 = vmatpush.msra.mxu0 %v396
    %470 = vmatpush.msra.mxu0 %v370
    %471 = vmatpush.msra.mxu0 %v366
    %472 = vmatpush.msra.mxu0 %v362
    %473 = vmatpush.msra.mxu0 %v358
    %474 = vmatmul.f32.gmra.mxu0 %v383
    %v475 = vpop.f32.mrf.mxu0
    %v476 = vadd.f32 %v379, %v475
    %477 = vdwg.mxu0
    %v478 = vsel %vm385, %v416, 0.0
    %v479 = vsel %vm385, %v436, 0.0
    %v480 = vadd.f32 %v478, %v479
    %v481 = vsel %vm385, %v456, 0.0
    %v482 = vadd.f32 %v480, %v481
    %v483 = vsel %vm385, %v476, 0.0
    %v484 = vadd.f32 %v482, %v483
    %485 = vadd.xlane.f32.xlu0 %v484
    %v486 = vpop.xlane.xlu0 %485
    %v487 = vmul.f32 %v486, 0.001953125
    %v488 = vmul.f32 %v416, %v416
    %v489 = vmul.f32 %v436, %v436
    %v490 = vmul.f32 %v456, %v456
    %v491 = vmul.f32 %v476, %v476
    %v492 = vsel %vm385, %v488, 0.0
    %v493 = vsel %vm385, %v489, 0.0
    %v494 = vadd.f32 %v492, %v493
    %v495 = vsel %vm385, %v490, 0.0
    %v496 = vadd.f32 %v494, %v495
    %v497 = vsel %vm385, %v491, 0.0
    %v498 = vadd.f32 %v496, %v497
    %499 = vadd.xlane.f32.xlu0 %v498
    %v500 = vpop.xlane.xlu0 %499
    %v501 = vmul.f32 %v500, 0.001953125
    %v502 = vmul.f32 %v487, %v487
    %v503 = vsub.f32 %v501, %v502
    %v504 = vld [vmem:[%s3] sm:$0xf]
    %v505 = vadd.f32 %v503, 0.8
    %v506 = vrsqrt.pop %v505
    %v507 = vmul.f32 %v506, %v505
    %v508 = vmul.f32 %v507, %v506
    %v509 = vmul.f32 0.5, %v508
    %v510 = vsub.f32 1.5, %v509
    %v511 = vmul.f32 %v506, %v510
    %vm512 = vweird.f32 %v505
    %vm513 = vweird.f32 %v506
    %vm514 = vmor %vm512, %vm513
    %v515 = vsel %vm514, %v506, %v511
    %v516 = vmul.f32 %v504, %v515
    %v517 = vld [vmem:[%s4] sm:$0xf]
    %v518 = vmul.f32 %v487, %v516
    %v519 = vsub.f32 %v517, %v518
    %s520 = sld [smem:[#allocation4]]
    %522 = vset.pattern.permute.xlu0 0
    %523 = vperm.xlu0 %522, %v516
    %v524 = vpop.permute.xlu0 %523
    %v526 = vmul.f32 %v416, %v524
    %v527 = vmul.f32 %v436, %v524
    %v528 = vmul.f32 %v456, %v524
    %v529 = vmul.f32 %v476, %v524
    %531 = vset.pattern.permute.xlu0 0
    %532 = vperm.xlu0 %531, %v519
    %v533 = vpop.permute.xlu0 %532
    %v535 = vadd.f32 %v526, %v533
    %v536 = vadd.f32 %v527, %v533
    %v537 = vadd.f32 %v528, %v533
    %v538 = vadd.f32 %v529, %v533
    %vm539 = vcmp.gt.f32.partialorder %v535, 0.0
    %vm540 = vcmp.gt.f32.partialorder %v536, 0.0
    %vm541 = vcmp.gt.f32.partialorder %v537, 0.0
    %vm542 = vcmp.gt.f32.partialorder %v538, 0.0
    %v543 = vstv %s520
    %v544 = vmul.f32 %v543, %v535
    %v545 = vmul.f32 %v543, %v536
    %v546 = vmul.f32 %v543, %v537
    %v547 = vmul.f32 %v543, %v538
    %v548 = vsel %vm539, %v535, %v544
    %v549 = vsel %vm540, %v536, %v545
    %v550 = vsel %vm541, %v537, %v546
    %v551 = vsel %vm542, %v538, %v547
    %552 = vst [vmem:[#allocation2 + $0x8] sm:$0xf] %v548
    %553 = vst [vmem:[#allocation2 + $0x10] sm:$0xf] %v549
    %v556 = vrot.slane %v550, 4
    %v557 = vrot.slane %v551, 4
    %560 = vst [vmem:[#allocation2 + $0x8] sm:$0xf0] %v556
    %561 = vst [vmem:[#allocation2 + $0x10] sm:$0xf0] %v557
    %v562 = vld [vmem:[#allocation2] sm:$0xff]
    %v563 = vld [vmem:[#allocation2 + $0x8] sm:$0xff]
    %v564 = vld [vmem:[#allocation2 + $0x10] sm:$0xff]
    %568 = vrot.lane.b32.xlu0 %v562, 17
    %v569 = vpop.permute.xlu0 %568
    %570 = vrot.lane.b32.xlu0 %v563, 17
    %v571 = vpop.permute.xlu0 %570
    %572 = vrot.lane.b32.xlu0 %v564, 17
    %v573 = vpop.permute.xlu0 %572
    %v574 = vsel %vm108, %v569, %v571
    %v575 = vsel %vm108, %v571, %v573
    %v578 = vsel %vm97, %v574, 0.0
    %v579 = vsel %vm98, %v575, 0.0
    %580 = vst [vmem:[#allocation3] sm:$0xf] %v578
    %581 = vst [vmem:[#allocation3 + $0x8] sm:$0xf] %v579
    %v584 = vrot.slane %v578, 4
    %v585 = vrot.slane %v579, 4
    %588 = vst [vmem:[#allocation3 + $0x10] sm:$0xf] %v584
    %589 = vst [vmem:[#allocation3 + $0x18] sm:$0xf] %v585
    %v590 = vld [vmem:[#allocation2] sm:$0xff]
    %v591 = vld [vmem:[#allocation2 + $0x8] sm:$0xff]
    %v592 = vld [vmem:[#allocation2 + $0x10] sm:$0xff]
    %v596 = vrot.slane %v590, 4
    %v597 = vrot.slane %v591, 4
    %v598 = vrot.slane %v592, 4
    %599 = vrot.lane.b32.xlu0 %v596, 16
    %v600 = vpop.permute.xlu0 %599
    %601 = vrot.lane.b32.xlu0 %v597, 16
    %v602 = vpop.permute.xlu0 %601
    %603 = vrot.lane.b32.xlu0 %v598, 16
    %v604 = vpop.permute.xlu0 %603
    %v605 = vsel %vm140, %v600, %v602
    %v606 = vsel %vm140, %v602, %v604
    %609 = vst [vmem:[#allocation3] sm:$0xf0] %v605
    %610 = vst [vmem:[#allocation3 + $0x8] sm:$0xf0] %v606
    %611 = vrot.lane.b32.xlu0 %v590, 16
    %v612 = vpop.permute.xlu0 %611
    %613 = vrot.lane.b32.xlu0 %v591, 16
    %v614 = vpop.permute.xlu0 %613
    %615 = vrot.lane.b32.xlu0 %v592, 16
    %v616 = vpop.permute.xlu0 %615
    %v617 = vsel %vm140, %v612, %v614
    %v618 = vsel %vm140, %v614, %v616
    %621 = vst [vmem:[#allocation3 + $0x10] sm:$0xf0] %v617
    %622 = vst [vmem:[#allocation3 + $0x18] sm:$0xf0] %v618
    %v623 = vld [vmem:[#allocation2] sm:$0xff]
    %v624 = vld [vmem:[#allocation2 + $0x8] sm:$0xff]
    %v625 = vld [vmem:[#allocation2 + $0x10] sm:$0xff]
    %629 = vrot.lane.b32.xlu0 %v623, 15
    %v630 = vpop.permute.xlu0 %629
    %631 = vrot.lane.b32.xlu0 %v624, 15
    %v632 = vpop.permute.xlu0 %631
    %633 = vrot.lane.b32.xlu0 %v625, 15
    %v634 = vpop.permute.xlu0 %633
    %v635 = vsel %vm175, %v630, %v632
    %v636 = vsel %vm175, %v632, %v634
    %v639 = vsel %vm164, %v635, 0.0
    %v640 = vsel %vm165, %v636, 0.0
    %641 = vst [vmem:[#allocation3 + $0x20] sm:$0xf] %v639
    %642 = vst [vmem:[#allocation3 + $0x28] sm:$0xf] %v640
    %v645 = vrot.slane %v639, 4
    %v646 = vrot.slane %v640, 4
    %649 = vst [vmem:[#allocation3 + $0x30] sm:$0xf] %v645
    %650 = vst [vmem:[#allocation3 + $0x38] sm:$0xf] %v646
    %v651 = vld [vmem:[#allocation2] sm:$0xff]
    %v652 = vld [vmem:[#allocation2 + $0x8] sm:$0xff]
    %v653 = vld [vmem:[#allocation2 + $0x10] sm:$0xff]
    %657 = vrot.lane.b32.xlu0 %v651, 1
    %v658 = vpop.permute.xlu0 %657
    %659 = vrot.lane.b32.xlu0 %v652, 1
    %v660 = vpop.permute.xlu0 %659
    %661 = vrot.lane.b32.xlu0 %v653, 1
    %v662 = vpop.permute.xlu0 %661
    %v663 = vsel %vm204, %v658, %v660
    %v664 = vsel %vm204, %v660, %v662
    %v667 = vsel %vm97, %v663, 0.0
    %v668 = vsel %vm98, %v664, 0.0
    %v671 = vrot.slane %v667, 4
    %v672 = vrot.slane %v668, 4
    %675 = vst [vmem:[#allocation3 + $0x20] sm:$0xf0] %v671
    %676 = vst [vmem:[#allocation3 + $0x28] sm:$0xf0] %v672
    %677 = vst [vmem:[#allocation3 + $0x30] sm:$0xf0] %v667
    %678 = vst [vmem:[#allocation3 + $0x38] sm:$0xf0] %v668
    %v679 = vld [vmem:[#allocation2 + $0x8] sm:$0xff]
    %v680 = vld [vmem:[#allocation2 + $0x10] sm:$0xff]
    %681 = vst [vmem:[#allocation3 + $0x40] sm:$0xf] %v679
    %682 = vst [vmem:[#allocation3 + $0x48] sm:$0xf] %v680
    %v685 = vrot.slane %v679, 4
    %v686 = vrot.slane %v680, 4
    %689 = vst [vmem:[#allocation3 + $0x50] sm:$0xf] %v685
    %690 = vst [vmem:[#allocation3 + $0x58] sm:$0xf] %v686
    %v691 = vld [vmem:[#allocation2 + $0x8] sm:$0xff]
    %v692 = vld [vmem:[#allocation2 + $0x10] sm:$0xff]
    %v693 = vld [vmem:[#allocation2 + $0x18] sm:$0xff]
    %697 = vrot.lane.b32.xlu0 %v691, 127
    %v698 = vpop.permute.xlu0 %697
    %699 = vrot.lane.b32.xlu0 %v692, 127
    %v700 = vpop.permute.xlu0 %699
    %701 = vrot.lane.b32.xlu0 %v693, 127
    %v702 = vpop.permute.xlu0 %701
    %v703 = vsel %vm245, %v698, %v700
    %v704 = vsel %vm245, %v700, %v702
    %v707 = vsel %vm164, %v703, 0.0
    %v708 = vsel %vm165, %v704, 0.0
    %v711 = vrot.slane %v707, 4
    %v712 = vrot.slane %v708, 4
    %715 = vst [vmem:[#allocation3 + $0x40] sm:$0xf0] %v711
    %716 = vst [vmem:[#allocation3 + $0x48] sm:$0xf0] %v712
    %717 = vst [vmem:[#allocation3 + $0x50] sm:$0xf0] %v707
    %718 = vst [vmem:[#allocation3 + $0x58] sm:$0xf0] %v708
    %v719 = vld [vmem:[#allocation2 + $0x8] sm:$0xff]
    %v720 = vld [vmem:[#allocation2 + $0x10] sm:$0xff]
    %v721 = vld [vmem:[#allocation2 + $0x18] sm:$0xff]
    %725 = vrot.lane.b32.xlu0 %v719, 113
    %v726 = vpop.permute.xlu0 %725
    %727 = vrot.lane.b32.xlu0 %v720, 113
    %v728 = vpop.permute.xlu0 %727
    %729 = vrot.lane.b32.xlu0 %v721, 113
    %v730 = vpop.permute.xlu0 %729
    %v731 = vsel %vm274, %v726, %v728
    %v732 = vsel %vm274, %v728, %v730
    %v735 = vsel %vm97, %v731, 0.0
    %v736 = vsel %vm98, %v732, 0.0
    %737 = vst [vmem:[#allocation3 + $0x60] sm:$0xf] %v735
    %738 = vst [vmem:[#allocation3 + $0x68] sm:$0xf] %v736
    %v741 = vrot.slane %v735, 4
    %v742 = vrot.slane %v736, 4
    %745 = vst [vmem:[#allocation3 + $0x70] sm:$0xf] %v741
    %746 = vst [vmem:[#allocation3 + $0x78] sm:$0xf] %v742
    %v747 = vld [vmem:[#allocation2 + $0x8] sm:$0xff]
    %v748 = vld [vmem:[#allocation2 + $0x10] sm:$0xff]
    %v749 = vld [vmem:[#allocation2 + $0x18] sm:$0xff]
    %v753 = vrot.slane %v747, 4
    %v754 = vrot.slane %v748, 4
    %v755 = vrot.slane %v749, 4
    %756 = vrot.lane.b32.xlu0 %v753, 112
    %v757 = vpop.permute.xlu0 %756
    %758 = vrot.lane.b32.xlu0 %v754, 112
    %v759 = vpop.permute.xlu0 %758
    %760 = vrot.lane.b32.xlu0 %v755, 112
    %v761 = vpop.permute.xlu0 %760
    %v762 = vsel %vm306, %v757, %v759
    %v763 = vsel %vm306, %v759, %v761
    %766 = vst [vmem:[#allocation3 + $0x60] sm:$0xf0] %v762
    %767 = vst [vmem:[#allocation3 + $0x68] sm:$0xf0] %v763
    %768 = vrot.lane.b32.xlu0 %v747, 112
    %v769 = vpop.permute.xlu0 %768
    %770 = vrot.lane.b32.xlu0 %v748, 112
    %v771 = vpop.permute.xlu0 %770
    %772 = vrot.lane.b32.xlu0 %v749, 112
    %v773 = vpop.permute.xlu0 %772
    %v774 = vsel %vm306, %v769, %v771
    %v775 = vsel %vm306, %v771, %v773
    %778 = vst [vmem:[#allocation3 + $0x70] sm:$0xf0] %v774
    %779 = vst [vmem:[#allocation3 + $0x78] sm:$0xf0] %v775
    %v780 = vld [vmem:[#allocation2 + $0x8] sm:$0xff]
    %v781 = vld [vmem:[#allocation2 + $0x10] sm:$0xff]
    %v782 = vld [vmem:[#allocation2 + $0x18] sm:$0xff]
    %786 = vrot.lane.b32.xlu0 %v780, 111
    %v787 = vpop.permute.xlu0 %786
    %788 = vrot.lane.b32.xlu0 %v781, 111
    %v789 = vpop.permute.xlu0 %788
    %790 = vrot.lane.b32.xlu0 %v782, 111
    %v791 = vpop.permute.xlu0 %790
    %v792 = vsel %vm337, %v787, %v789
    %v793 = vsel %vm337, %v789, %v791
    %v796 = vsel %vm164, %v792, 0.0
    %v797 = vsel %vm165, %v793, 0.0
    %798 = vst [vmem:[#allocation3 + $0x80] sm:$0xf] %v796
    %799 = vst [vmem:[#allocation3 + $0x88] sm:$0xf] %v797
    %v802 = vrot.slane %v796, 4
    %v803 = vrot.slane %v797, 4
    %806 = vst [vmem:[#allocation3 + $0x90] sm:$0xf] %v802
    %807 = vst [vmem:[#allocation3 + $0x98] sm:$0xf] %v803
    %v808 = vld [vmem:[%s6] sm:$0xf]
    %v809 = vld [vmem:[#allocation3] sm:$0xff]
    %v810 = vld [vmem:[#allocation3 + $0x8] sm:$0xff]
    %v811 = vld [vmem:[#allocation3 + $0x10] sm:$0xff]
    %v812 = vld [vmem:[#allocation3 + $0x18] sm:$0xff]
    %v813 = vld [vmem:[#allocation3 + $0x20] sm:$0xff]
    %v814 = vld [vmem:[#allocation3 + $0x28] sm:$0xff]
    %v815 = vld [vmem:[#allocation3 + $0x30] sm:$0xff]
    %v816 = vld [vmem:[#allocation3 + $0x38] sm:$0xff]
    %v817 = vld [vmem:[#allocation3 + $0x40] sm:$0xff]
    %v818 = vld [vmem:[#allocation3 + $0x48] sm:$0xff]
    %v819 = vld [vmem:[#allocation3 + $0x50] sm:$0xff]
    %v820 = vld [vmem:[#allocation3 + $0x58] sm:$0xff]
    %v821 = vld [vmem:[#allocation3 + $0x60] sm:$0xff]
    %v822 = vld [vmem:[#allocation3 + $0x68] sm:$0xff]
    %v823 = vld [vmem:[#allocation3 + $0x70] sm:$0xff]
    %v824 = vld [vmem:[#allocation3 + $0x78] sm:$0xff]
    %v825 = vld [vmem:[#allocation3 + $0x80] sm:$0xf]
    %v826 = vld [vmem:[#allocation3 + $0x88] sm:$0xf]
    %v827 = vld [vmem:[#allocation3 + $0x90] sm:$0xf]
    %v828 = vld [vmem:[#allocation3 + $0x98] sm:$0xf]
    %v829 = vld [vmem:[%s7] sm:$0xf]
    %831 = vset.pattern.permute.xlu0 0
    %832 = vperm.xlu0 %831, %v829
    %v833 = vpop.permute.xlu0 %832
    %v836 = vsel %vm381, %v808, 0
    %v839 = vsel %vm385, %v825, 0
    %v842 = vsel %vm385, %v826, 0
    %v845 = vsel %vm385, %v827, 0
    %v848 = vsel %vm385, %v828, 0
    %850 = vmatpush.msra.mxu0 0.0
    %851 = vmatpush.msra.mxu0 0.0
    %852 = vmatpush.msra.mxu0 0.0
    %853 = vmatpush.msra.mxu0 0.0
    %854 = vmatpush.msra.mxu0 0.0
    %855 = vmatpush.msra.mxu0 0.0
    %856 = vmatpush.msra.mxu0 0.0
    %857 = vmatpush.msra.mxu0 0.0
    %858 = vmatpush.msra.mxu0 0.0
    %859 = vmatpush.msra.mxu0 0.0
    %860 = vmatpush.msra.mxu0 0.0
    %861 = vmatpush.msra.mxu0 %v839
    %862 = vmatpush.msra.mxu0 %v821
    %863 = vmatpush.msra.mxu0 %v817
    %864 = vmatpush.msra.mxu0 %v813
    %865 = vmatpush.msra.mxu0 %v809
    %866 = vmatmul.f32.gmra.mxu0 %v836
    %v867 = vpop.f32.mrf.mxu0
    %v868 = vadd.f32 %v833, %v867
    %869 = vdwg.mxu0
    %870 = vmatpush.msra.mxu0 0.0
    %871 = vmatpush.msra.mxu0 0.0
    %872 = vmatpush.msra.mxu0 0.0
    %873 = vmatpush.msra.mxu0 0.0
    %874 = vmatpush.msra.mxu0 0.0
    %875 = vmatpush.msra.mxu0 0.0
    %876 = vmatpush.msra.mxu0 0.0
    %877 = vmatpush.msra.mxu0 0.0
    %878 = vmatpush.msra.mxu0 0.0
    %879 = vmatpush.msra.mxu0 0.0
    %880 = vmatpush.msra.mxu0 0.0
    %881 = vmatpush.msra.mxu0 %v842
    %882 = vmatpush.msra.mxu0 %v822
    %883 = vmatpush.msra.mxu0 %v818
    %884 = vmatpush.msra.mxu0 %v814
    %885 = vmatpush.msra.mxu0 %v810
    %886 = vmatmul.f32.gmra.mxu0 %v836
    %v887 = vpop.f32.mrf.mxu0
    %v888 = vadd.f32 %v833, %v887
    %889 = vdwg.mxu0
    %890 = vmatpush.msra.mxu0 0.0
    %891 = vmatpush.msra.mxu0 0.0
    %892 = vmatpush.msra.mxu0 0.0
    %893 = vmatpush.msra.mxu0 0.0
    %894 = vmatpush.msra.mxu0 0.0
    %895 = vmatpush.msra.mxu0 0.0
    %896 = vmatpush.msra.mxu0 0.0
    %897 = vmatpush.msra.mxu0 0.0
    %898 = vmatpush.msra.mxu0 0.0
    %899 = vmatpush.msra.mxu0 0.0
    %900 = vmatpush.msra.mxu0 0.0
    %901 = vmatpush.msra.mxu0 %v845
    %902 = vmatpush.msra.mxu0 %v823
    %903 = vmatpush.msra.mxu0 %v819
    %904 = vmatpush.msra.mxu0 %v815
    %905 = vmatpush.msra.mxu0 %v811
    %906 = vmatmul.f32.gmra.mxu0 %v836
    %v907 = vpop.f32.mrf.mxu0
    %v908 = vadd.f32 %v833, %v907
    %909 = vdwg.mxu0
    %910 = vmatpush.msra.mxu0 0.0
    %911 = vmatpush.msra.mxu0 0.0
    %912 = vmatpush.msra.mxu0 0.0
    %913 = vmatpush.msra.mxu0 0.0
    %914 = vmatpush.msra.mxu0 0.0
    %915 = vmatpush.msra.mxu0 0.0
    %916 = vmatpush.msra.mxu0 0.0
    %917 = vmatpush.msra.mxu0 0.0
    %918 = vmatpush.msra.mxu0 0.0
    %919 = vmatpush.msra.mxu0 0.0
    %920 = vmatpush.msra.mxu0 0.0
    %921 = vmatpush.msra.mxu0 %v848
    %922 = vmatpush.msra.mxu0 %v824
    %923 = vmatpush.msra.mxu0 %v820
    %924 = vmatpush.msra.mxu0 %v816
    %925 = vmatpush.msra.mxu0 %v812
    %926 = vmatmul.f32.gmra.mxu0 %v836
    %v927 = vpop.f32.mrf.mxu0
    %v928 = vadd.f32 %v833, %v927
    %929 = vdwg.mxu0
    %v930 = vsel %vm385, %v868, 0.0
    %v931 = vsel %vm385, %v888, 0.0
    %v932 = vadd.f32 %v930, %v931
    %v933 = vsel %vm385, %v908, 0.0
    %v934 = vadd.f32 %v932, %v933
    %v935 = vsel %vm385, %v928, 0.0
    %v936 = vadd.f32 %v934, %v935
    %937 = vadd.xlane.f32.xlu0 %v936
    %v938 = vpop.xlane.xlu0 %937
    %v939 = vmul.f32 %v938, 0.001953125
    %v940 = vmul.f32 %v868, %v868
    %v941 = vmul.f32 %v888, %v888
    %v942 = vmul.f32 %v908, %v908
    %v943 = vmul.f32 %v928, %v928
    %v944 = vsel %vm385, %v940, 0.0
    %v945 = vsel %vm385, %v941, 0.0
    %v946 = vadd.f32 %v944, %v945
    %v947 = vsel %vm385, %v942, 0.0
    %v948 = vadd.f32 %v946, %v947
    %v949 = vsel %vm385, %v943, 0.0
    %v950 = vadd.f32 %v948, %v949
    %951 = vadd.xlane.f32.xlu0 %v950
    %v952 = vpop.xlane.xlu0 %951
    %v953 = vmul.f32 %v952, 0.001953125
    %v954 = vmul.f32 %v939, %v939
    %v955 = vsub.f32 %v953, %v954
    %v956 = vld [vmem:[%s8] sm:$0xf]
    %v957 = vadd.f32 %v955, 0.8
    %v958 = vrsqrt.pop %v957
    %v959 = vmul.f32 %v958, %v957
    %v960 = vmul.f32 %v959, %v958
    %v961 = vmul.f32 0.5, %v960
    %v962 = vsub.f32 1.5, %v961
    %v963 = vmul.f32 %v958, %v962
    %vm964 = vweird.f32 %v957
    %vm965 = vweird.f32 %v958
    %vm966 = vmor %vm964, %vm965
    %v967 = vsel %vm966, %v958, %v963
    %v968 = vmul.f32 %v956, %v967
    %v969 = vld [vmem:[%s9] sm:$0xf]
    %v970 = vmul.f32 %v939, %v968
    %v971 = vsub.f32 %v969, %v970
    %v972 = vld [vmem:[%s0] sm:$0xff]
    %974 = vset.pattern.permute.xlu0 0
    %975 = vperm.xlu0 %974, %v968
    %v976 = vpop.permute.xlu0 %975
    %v978 = vmul.f32 %v868, %v976
    %v979 = vmul.f32 %v888, %v976
    %v982 = vrot.slane %v979, 4
    %v983 = vsel %vm385, %v978, %v982
    %v985 = vadd.f32 %v972, %v983
    %987 = vset.pattern.permute.xlu0 0
    %988 = vperm.xlu0 %987, %v971
    %v989 = vpop.permute.xlu0 %988
    %v991 = vunpack.c.l.s4 839922192
    %v992 = vunpack.c.0.s8 %v991
    %v993 = vperm.slane %v989, %v992
    %v995 = vadd.f32 %v985, %v993
    %996 = vst [vmem:[#allocation5] sm:$0xff] %v995
    %v997 = vld [vmem:[%s81] sm:$0xff]
    %v998 = vmul.f32 %v908, %v976
    %v999 = vmul.f32 %v928, %v976
    %v1002 = vrot.slane %v999, 4
    %v1003 = vsel %vm385, %v998, %v1002
    %v1005 = vadd.f32 %v997, %v1003
    %v1006 = vadd.f32 %v1005, %v993
    %s1007 = scalar_lea.vmem [#allocation5], 8
    %1008 = vst [vmem:[%s1007] sm:$0xff] %v1006
    // Predicated region
    $region42: #{tpu_custom_call.1} parent=1 // pred_check
      _
    $region43: #{tpu_custom_call.1} parent=1 // pred_check_branch
      %1010 = sbr.rel (0) target = $region45
    $region44: #{tpu_custom_call.1} parent=1 // pred_region
      %1012 = vsyncadd [#allocation6], 0
      %s1013 = sshll.u32 [#allocation5], 4
      %s1014 = int_to_ptr.vmem [resolvable:$true] %s1013
      %s1015 = sshll.u32 %s10, 4
      %s1016 = int_to_ptr.hbm [resolvable:$true] %s1015
      %1021 = dma.vmem_to_hbm [thread:$0]  %s1014, 256, %s1016, [#allocation6], 128, 128, 8
    $region45: #{tpu_custom_call.1} parent=1 // pred_fallthru
      _
    // Predicated region
    $region46: #{tpu_custom_call.1} parent=1 // pred_check
      _
    $region47: #{tpu_custom_call.1} parent=1 // pred_check_branch
      %1023 = sbr.rel (0) target = $region49
    $region48: #{tpu_custom_call.1} parent=1 // pred_region
      %1025 = dma.done [#allocation6], 256
    $region49: #{tpu_custom_call.1} parent=1 // pred_fallthru
      _
    %1026 = vsyncpa [#allocation6], 1

</llo_original>
